<compile_context>
chip_gen: v7x
topology: tpu7x:2x2x1
jax: 0.10.0
libtpu: 0.0.40
codegen_flags: <defaults>
</compile_context>

<pallas_src>
import jax
import jax.numpy as jnp
from jax import lax
from jax.experimental import pallas as pl
from jax.experimental.pallas import tpu as pltpu

EPS = 1e-5      # BatchNorm1d default eps
LANE = 128      # TPU lane width; only the final expert dim is padded to this


# ---------------------------------------------------------------------------
# Fused CGC kernel (experts + gates + pooling in one pallas_call)
# ---------------------------------------------------------------------------
def _make_cgc_kernel(n_task, n_es, n_esh, n_inner, d1, has_shared,
                     compute_dtype, approx_recip):
    n_inputs = n_task + 1
    e_all = n_task * n_es + n_esh

    def _softmax_lastdim(z):
        m = jnp.max(z, axis=-1, keepdims=True)
        e = jnp.exp(z - m)
        s = jnp.sum(e, axis=-1, keepdims=True)
        if approx_recip:
            # EUP slot -> essentially free next to VPU/MXU work.
            return e * pl.reciprocal(s, approx=True)
        return e / s

    def kernel(*refs):
        x_ref, w1_ref, b1_ref = refs[0], refs[1], refs[2]
        p = 3
        lrefs = refs[p:p + 2 * n_inner]
        p += 2 * n_inner
        gw_ref, gb_ref = refs[p], refs[p + 1]
        p += 2
        if has_shared:
            gsw_ref, gsb_ref = refs[p], refs[p + 1]
            p += 2
        o_ref = refs[p]

        x_all = x_ref[...]                          # (n_inputs, tb, Din) f32
        cdt = compute_dtype

        # ---- layer 1: experts of each input stacked along N (one matmul / input) ----
        h = []                                      # per-expert activations (tb, d1)
        for i in range(n_inputs):
            ne_i = n_es if i < n_task else n_esh
            y = jnp.dot(x_all[i].astype(cdt), w1_ref[i],
                        preferred_element_type=jnp.float32)
            y = jnp.maximum(y + b1_ref[i], 0.0)     # ReLU; Dropout == identity (eval)
            for j in range(ne_i):
                h.append(y[:, j * d1:(j + 1) * d1])
        # h is ordered [task0 experts, task1 experts, ..., shared experts].

        # ---- layers 2..L: per-expert matmuls (static loop; E is tiny) ----
        for l in range(n_inner):
            w_ref, b_ref = lrefs[2 * l], lrefs[2 * l + 1]
            h = [jnp.maximum(
                    jnp.dot(h[e].astype(cdt), w_ref[e],
                            preferred_element_type=jnp.float32) + b_ref[e], 0.0)
                 for e in range(e_all)]

        # ---- task-specific gates + weighted pooling (broadcast-mul-accumulate) ----
        for t in range(n_task):
            logits = jnp.dot(x_all[t], gw_ref[t],
                             preferred_element_type=jnp.float32) + gb_ref[t]
            gate = _softmax_lastdim(logits)          # (tb, n_es + n_esh)
            sel = h[t * n_es:(t + 1) * n_es] + h[n_task * n_es:]
            acc = gate[:, 0:1] * sel[0]
            for j in range(1, len(sel)):
                acc = acc + gate[:, j:j + 1] * sel[j]
            o_ref[t] = acc

        # ---- shared gate over all experts (only when cur_level < n_level) ----
        if has_shared:
            logits = jnp.dot(x_all[n_task], gsw_ref[0],
                             preferred_element_type=jnp.float32) + gsb_ref[0]
            gate = _softmax_lastdim(logits)          # (tb, E)
            acc = gate[:, 0:1] * h[0]
            for e in range(1, e_all):
                acc = acc + gate[:, e:e + 1] * h[e]
            o_ref[n_task] = acc

    return kernel


def cgc_forward(params, x_list, cur_level, n_level, n_task, n_es, n_esh,
                compute_dtype=jnp.float32, batch_block=None, approx_recip=None):
    """Fused CGC forward: one pallas_call for experts + gates + pooling.

    batch_block: None -> grid-less, fully VMEM-resident (best at small B, and on
    1-TC v5e/v6e).  An int -> batch-tiled grid with dimension_semantics
    ("parallel",) so the kernel shards across v7x's two TensorCores at large B.
    """
    if approx_recip is None:
        approx_recip = (jnp.dtype(compute_dtype) == jnp.dtype(jnp.bfloat16))
    has_shared = cur_level < n_level
    n_inputs = n_task + 1
    x_all = jnp.stack(x_list, axis=0)                # (n_inputs, B, Din) — distinct inputs only
    B = x_all.shape[1]
    d_pad = params["d_pad"]
    d_out = params["d_out"]
    d1 = params["d1"]
    n_inner = len(params["layers"])
    n_out = n_task + (1 if has_shared else 0)

    # Expert weights: use as stored (bf16 via cast_expert_weights preferred so the
    # HBM copy — and thus the DMA — is already narrow); cast here only if needed.
    def _as_cdt(w):
        return w if w.dtype == jnp.dtype(compute_dtype) else w.astype(compute_dtype)

    args = [x_all, _as_cdt(params["w1"]), params["b1"]]
    for (w, b) in params["layers"]:
        args += [_as_cdt(w), b]
    args += [params["gate_spec_w"], params["gate_spec_b"]]
    if has_shared:
        args += [params["gate_shared_w"], params["gate_shared_b"]]

    # VMEM budget from the actual resident footprint vs this generation's capacity
    # (v7x: 64 MiB/TC; v5e/v6e: 128 MiB).  4x covers activations + double-buffering.
    footprint = sum(int(a.size) * a.dtype.itemsize for a in args) + n_out * B * d_pad * 4
    try:
        vmem_cap = int(getattr(pltpu.get_tpu_info(), "vmem_capacity_bytes", 64 << 20))
    except Exception:  # pragma: no cover - conservative fallback
        vmem_cap = 64 << 20
    vmem_limit = min(max(4 * footprint + (8 << 20), 16 << 20), int(0.75 * vmem_cap))

    kernel = _make_cgc_kernel(n_task, n_es, n_esh, n_inner, d1, has_shared,
                              compute_dtype, approx_recip)
    out_shape = jax.ShapeDtypeStruct((n_out, B, d_pad), jnp.float32)

    if batch_block is None or batch_block >= B:
        # Grid-less: one launch, everything VMEM-resident.
        out = pl.pallas_call(
            kernel,
            out_shape=out_shape,
            in_specs=[pl.BlockSpec(memory_space=pltpu.MemorySpace.VMEM) for _ in args],
            out_specs=pl.BlockSpec(memory_space=pltpu.MemorySpace.VMEM),
            compiler_params=pltpu.CompilerParams(vmem_limit_bytes=vmem_limit),
        )(*args)
    else:
        # Batch-tiled grid (v7x megacore / VMEM-budget fallback at large B).
        assert B % batch_block == 0, "batch must be divisible by batch_block"
        nb = B // batch_block
        # TODO(synk): auto-derive batch_block from the VMEM budget instead of a manual knob.

        def _const_spec(a):
            nd = a.ndim
            return pl.BlockSpec(a.shape, lambda i: (0,) * nd)   # weights fetched once

        in_specs = [pl.BlockSpec((n_inputs, batch_block, x_all.shape[2]),
                                 lambda i: (0, i, 0))]
        in_specs += [_const_spec(a) for a in args[1:]]
        out_specs = pl.BlockSpec((n_out, batch_block, d_pad), lambda i: (0, i, 0))
        out = pl.pallas_call(
            kernel,
            out_shape=out_shape,
            grid=(nb,),
            in_specs=in_specs,
            out_specs=out_specs,
            compiler_params=pltpu.CompilerParams(
                dimension_semantics=("parallel",),
                vmem_limit_bytes=vmem_limit),
        )(*args)

    return [out[i, :, :d_out] for i in range(n_out)]


def cast_expert_weights(params, dtype):
    """Store expert (not gate) weights in `dtype` in HBM; biases stay f32."""
    p = dict(params)
    p["w1"] = params["w1"].astype(dtype)
    p["layers"] = [(w.astype(dtype), b) for (w, b) in params["layers"]]
    return p


# ---------------------------------------------------------------------------
# Parameter setup (plain JAX glue, deterministic, BN folded, minimal padding)
# ---------------------------------------------------------------------------
def _fold_bn(w, b, gamma, beta, mean, var):
    scale = gamma / jnp.sqrt(var + EPS)
    return w * scale[None, :], (b - mean) * scale + beta


def _linear_bn(key, din, dout):
    k = jax.random.split(key, 6)
    w = 0.1 * jax.random.normal(k[0], (din, dout), jnp.float32)
    b = 0.1 * jax.random.normal(k[1], (dout,), jnp.float32)
    gamma = 1.0 + 0.1 * jax.random.normal(k[2], (dout,), jnp.float32)
    beta = 0.1 * jax.random.normal(k[3], (dout,), jnp.float32)
    mean = 0.1 * jax.random.normal(k[4], (dout,), jnp.float32)
    var = 1.0 + jnp.abs(jax.random.normal(k[5], (dout,), jnp.float32))
    return _fold_bn(w, b, gamma, beta, mean, var)


def _round_up(x, m):
    return ((x + m - 1) // m) * m


def init_cgc_params(key, n_task, n_es, n_esh, input_dims, expert_dims,
                    cur_level, n_level):
    e_all = n_task * n_es + n_esh
    n_inputs = n_task + 1
    ng = n_es + n_esh
    maxne = max(n_es, n_esh)
    n_layers = len(expert_dims)
    dims = [input_dims] + list(expert_dims)

    n_keys = e_all * n_layers + n_task + 1
    keys = jax.random.split(key, n_keys)
    ki = iter(range(n_keys))

    # Per-expert raw (BN-folded, unpadded) layer weights — also used by the reference.
    raw = []
    for _ in range(e_all):
        lw = []
        for l in range(n_layers):
            lw.append(_linear_bn(keys[next(ki)], dims[l], dims[l + 1]))
        raw.append(lw)

    d_last_pad = _round_up(expert_dims[-1], LANE)       # only the final dim is lane-padded
    d1 = d_last_pad if n_layers == 1 else expert_dims[0]

    # Layer 1: per-input packing with the experts stacked along N.
    w1_list, b1_list = [], []
    for i in range(n_inputs):
        e_ids = (list(range(i * n_es, (i + 1) * n_es)) if i < n_task
                 else list(range(n_task * n_es, e_all)))
        ws, bs = [], []
        for e in e_ids:
            w, b = raw[e][0]
            if n_layers == 1:  # final layer -> lane-pad (zeros stay zero through ReLU)
                w = jnp.pad(w, ((0, 0), (0, d1 - expert_dims[0])))
                b = jnp.pad(b, ((0, d1 - expert_dims[0]),))
            ws.append(w)
            bs.append(b)
        wcat = jnp.concatenate(ws, axis=1)
        bcat = jnp.concatenate(bs, axis=0)
        pad_cols = maxne * d1 - wcat.shape[1]
        if pad_cols:
            wcat = jnp.pad(wcat, ((0, 0), (0, pad_cols)))
            bcat = jnp.pad(bcat, ((0, pad_cols),))
        w1_list.append(wcat)
        b1_list.append(bcat.reshape(1, -1))
    w1 = jnp.stack(w1_list, 0)                           # (n_inputs, Din, maxne*d1)
    b1 = jnp.stack(b1_list, 0)                           # (n_inputs, 1, maxne*d1)

    # Layers 2..L: stacked over experts; intermediates unpadded, final padded to 128.
    layers = []
    for l in range(1, n_layers):
        dout_l = expert_dims[l]
        pad_out = d_last_pad if l == n_layers - 1 else dout_l
        ws, bs = [], []
        for e in range(e_all):
            w, b = raw[e][l]
            w = jnp.pad(w, ((0, 0), (0, pad_out - dout_l)))
            b = jnp.pad(b, ((0, pad_out - dout_l),))
            ws.append(w)
            bs.append(b.reshape(1, -1))
        layers.append((jnp.stack(ws, 0), jnp.stack(bs, 0)))

    gw, gb = [], []
    for _ in range(n_task):
        w, b = _linear_bn(keys[next(ki)], input_dims, ng)
        gw.append(w)
        gb.append(b.reshape(1, ng))

    params = {
        "w1": w1, "b1": b1, "layers": layers,
        "gate_spec_w": jnp.stack(gw, 0),                 # (n_task, Din, Ng)
        "gate_spec_b": jnp.stack(gb, 0),                 # (n_task, 1, Ng)
        "d_out": expert_dims[-1], "d_pad": d_last_pad, "d1": d1,
        "ref_expert_raw": raw,                           # for the pure-JAX reference
    }
    if cur_level < n_level:
        w, b = _linear_bn(keys[next(ki)], input_dims, e_all)
        params["gate_shared_w"] = w[None]                # (1, Din, E)
        params["gate_shared_b"] = b.reshape(1, 1, e_all)
    return params


# ---------------------------------------------------------------------------
# Pure-JAX reference (mirror of the PyTorch forward, eval mode, unpadded)
# ---------------------------------------------------------------------------
def cgc_reference(params, x_list, cur_level, n_level, n_task, n_es, n_esh):
    hp = lax.Precision.HIGHEST
    e_all = n_task * n_es + n_esh
    expert_outs = []
    for e in range(e_all):
        x = x_list[e // n_es] if e < n_task * n_es else x_list[-1]
        for (w, b) in params["ref_expert_raw"][e]:
            x = jnp.maximum(jnp.dot(x, w, precision=hp) + b, 0.0)
        expert_outs.append(x)
    expert_outs = jnp.stack(expert_outs, 0)              # (E, B, d_out)
    outs = []
    for t in range(n_task):
        logits = jnp.dot(x_list[t], params["gate_spec_w"][t], precision=hp) \
                 + params["gate_spec_b"][t, 0]
        gate = jax.nn.softmax(logits, axis=-1)
        cur = jnp.concatenate([expert_outs[t * n_es:(t + 1) * n_es],
                               expert_outs[n_task * n_es:]], 0)
        outs.append(jnp.einsum('be,ebd->bd', gate, cur, precision=hp))
    if cur_level < n_level:
        logits = jnp.dot(x_list[-1], params["gate_shared_w"][0], precision=hp) \
                 + params["gate_shared_b"][0, 0]
        gate = jax.nn.softmax(logits, axis=-1)
        outs.append(jnp.einsum('be,ebd->bd', gate, expert_outs, precision=hp))
    return outs


# ---------------------------------------------------------------------------
if __name__ == "__main__":
    # CGC config
    cur_level, n_level = 1, 2
    n_task, n_es, n_esh = 2, 2, 2
    input_dims = 32
    expert_dims = [32, 16]        # expert_params["dims"]; relu; dropout (eval) = id
    batch = 16

    key = jax.random.PRNGKey(0)
    kp, kx = jax.random.split(key)
    params = init_cgc_params(kp, n_task, n_es, n_esh, input_dims, expert_dims,
                             cur_level, n_level)
    xkeys = jax.random.split(kx, n_task + 1)
    x_list = [jax.random.normal(xkeys[i], (batch, input_dims), jnp.float32)
              for i in range(n_task + 1)]

    cfg = dict(cur_level=cur_level, n_level=n_level,
               n_task=n_task, n_es=n_es, n_esh=n_esh)

    refs = cgc_reference(params, x_list, **cfg)

    # 1) grid-less, fully VMEM-resident f32 path (exact check)
    outs = cgc_forward(params, x_list, approx_recip=False, **cfg)
    outs = [jax.block_until_ready(o) for o in outs]
    assert len(outs) == n_task + 1
    for o, r in zip(outs, refs):
        assert o.shape == (batch, expert_dims[-1])
        assert jnp.allclose(o, r, atol=1e-4, rtol=1e-4)

    # 2) bf16 fast path: expert weights stored bf16 in HBM, f32 accumulation,
    #    EUP approx-reciprocal softmax.
    params_bf16 = cast_expert_weights(params, jnp.bfloat16)
    outs_bf16 = cgc_forward(params_bf16, x_list, compute_dtype=jnp.bfloat16, **cfg)
    outs_bf16 = [jax.block_until_ready(o) for o in outs_bf16]
    for o, r in zip(outs_bf16, refs):
        assert o.shape == (batch, expert_dims[-1])
        assert jnp.allclose(o, r, atol=5e-2, rtol=5e-2)

    # 3) batch-tiled grid path ("parallel" batch axis -> v7x 2-TC sharding at large B)
    outs_grid = cgc_forward(params, x_list, batch_block=8, approx_recip=False, **cfg)
    outs_grid = [jax.block_until_ready(o) for o in outs_grid]
    for o, r in zip(outs_grid, refs):
        assert o.shape == (batch, expert_dims[-1])
        assert jnp.allclose(o, r, atol=1e-4, rtol=1e-4)

    print("KERNEL_OK")
</pallas_src>

<mosaic_0001>
module attributes {stable_mosaic.version = 11 : i64} {
  func.func @kernel(%arg0: memref<3x16x32xf32, #tpu.memory_space<vmem>>, %arg1: memref<3x32x64xf32, #tpu.memory_space<vmem>>, %arg2: memref<3x1x64xf32, #tpu.memory_space<vmem>>, %arg3: memref<6x32x128xf32, #tpu.memory_space<vmem>>, %arg4: memref<6x1x128xf32, #tpu.memory_space<vmem>>, %arg5: memref<2x32x4xf32, #tpu.memory_space<vmem>>, %arg6: memref<2x1x4xf32, #tpu.memory_space<vmem>>, %arg7: memref<1x32x6xf32, #tpu.memory_space<vmem>>, %arg8: memref<1x1x6xf32, #tpu.memory_space<vmem>>, %arg9: memref<3x16x128xf32, #tpu.memory_space<vmem>>) attributes {dimension_semantics = [], scalar_prefetch = 0 : i64, scratch_operands = 0 : i64, tpu.core_type = #tpu.core_type<tc>} {
    %c0 = arith.constant 0 : index
    %c0_0 = arith.constant 0 : index
    %c0_1 = arith.constant 0 : index
    %0 = vector.load %arg0[%c0, %c0_0, %c0_1] : memref<3x16x32xf32, #tpu.memory_space<vmem>>, vector<3x16x32xf32>
    %1 = vector.extract_strided_slice %0 {offsets = [0, 0, 0], sizes = [1, 16, 32], strides = [1, 1, 1]} : vector<3x16x32xf32> to vector<1x16x32xf32>
    %2 = vector.shape_cast %1 : vector<1x16x32xf32> to vector<16x32xf32>
    %c0_2 = arith.constant 0 : index
    %c0_3 = arith.constant 0 : index
    %c0_4 = arith.constant 0 : index
    %3 = vector.load %arg1[%c0_2, %c0_3, %c0_4] : memref<3x32x64xf32, #tpu.memory_space<vmem>>, vector<1x32x64xf32>
    %4 = vector.shape_cast %3 : vector<1x32x64xf32> to vector<32x64xf32>
    %cst = arith.constant dense<0.000000e+00> : vector<16x64xf32>
    %5 = tpu.matmul %2, %4, %cst {dimension_numbers = #tpu.dot_dimension_numbers<[1], [0], [0], [1], [0, 0, 1, 1], [], []>} : vector<16x32xf32>, vector<32x64xf32>, vector<16x64xf32> -> vector<16x64xf32>
    %c0_5 = arith.constant 0 : index
    %c0_6 = arith.constant 0 : index
    %c0_7 = arith.constant 0 : index
    %6 = vector.load %arg2[%c0_5, %c0_6, %c0_7] : memref<3x1x64xf32, #tpu.memory_space<vmem>>, vector<1x1x64xf32>
    %7 = vector.shape_cast %6 : vector<1x1x64xf32> to vector<1x64xf32>
    %8 = vector.broadcast %7 : vector<1x64xf32> to vector<16x64xf32>
    %9 = arith.addf %5, %8 : vector<16x64xf32>
    %cst_8 = arith.constant 0.000000e+00 : f32
    %10 = vector.broadcast %cst_8 : f32 to vector<16x64xf32>
    %11 = arith.maximumf %9, %10 : vector<16x64xf32>
    %12 = vector.extract_strided_slice %11 {offsets = [0, 0], sizes = [16, 32], strides = [1, 1]} : vector<16x64xf32> to vector<16x32xf32>
    %13 = vector.extract_strided_slice %11 {offsets = [0, 32], sizes = [16, 32], strides = [1, 1]} : vector<16x64xf32> to vector<16x32xf32>
    %14 = vector.extract_strided_slice %0 {offsets = [1, 0, 0], sizes = [1, 16, 32], strides = [1, 1, 1]} : vector<3x16x32xf32> to vector<1x16x32xf32>
    %15 = vector.shape_cast %14 : vector<1x16x32xf32> to vector<16x32xf32>
    %c1 = arith.constant 1 : index
    %c0_9 = arith.constant 0 : index
    %c0_10 = arith.constant 0 : index
    %16 = vector.load %arg1[%c1, %c0_9, %c0_10] : memref<3x32x64xf32, #tpu.memory_space<vmem>>, vector<1x32x64xf32>
    %17 = vector.shape_cast %16 : vector<1x32x64xf32> to vector<32x64xf32>
    %cst_11 = arith.constant dense<0.000000e+00> : vector<16x64xf32>
    %18 = tpu.matmul %15, %17, %cst_11 {dimension_numbers = #tpu.dot_dimension_numbers<[1], [0], [0], [1], [0, 0, 1, 1], [], []>} : vector<16x32xf32>, vector<32x64xf32>, vector<16x64xf32> -> vector<16x64xf32>
    %c1_12 = arith.constant 1 : index
    %c0_13 = arith.constant 0 : index
    %c0_14 = arith.constant 0 : index
    %19 = vector.load %arg2[%c1_12, %c0_13, %c0_14] : memref<3x1x64xf32, #tpu.memory_space<vmem>>, vector<1x1x64xf32>
    %20 = vector.shape_cast %19 : vector<1x1x64xf32> to vector<1x64xf32>
    %21 = vector.broadcast %20 : vector<1x64xf32> to vector<16x64xf32>
    %22 = arith.addf %18, %21 : vector<16x64xf32>
    %cst_15 = arith.constant 0.000000e+00 : f32
    %23 = vector.broadcast %cst_15 : f32 to vector<16x64xf32>
    %24 = arith.maximumf %22, %23 : vector<16x64xf32>
    %25 = vector.extract_strided_slice %24 {offsets = [0, 0], sizes = [16, 32], strides = [1, 1]} : vector<16x64xf32> to vector<16x32xf32>
    %26 = vector.extract_strided_slice %24 {offsets = [0, 32], sizes = [16, 32], strides = [1, 1]} : vector<16x64xf32> to vector<16x32xf32>
    %27 = vector.extract_strided_slice %0 {offsets = [2, 0, 0], sizes = [1, 16, 32], strides = [1, 1, 1]} : vector<3x16x32xf32> to vector<1x16x32xf32>
    %28 = vector.shape_cast %27 : vector<1x16x32xf32> to vector<16x32xf32>
    %c2 = arith.constant 2 : index
    %c0_16 = arith.constant 0 : index
    %c0_17 = arith.constant 0 : index
    %29 = vector.load %arg1[%c2, %c0_16, %c0_17] : memref<3x32x64xf32, #tpu.memory_space<vmem>>, vector<1x32x64xf32>
    %30 = vector.shape_cast %29 : vector<1x32x64xf32> to vector<32x64xf32>
    %cst_18 = arith.constant dense<0.000000e+00> : vector<16x64xf32>
    %31 = tpu.matmul %28, %30, %cst_18 {dimension_numbers = #tpu.dot_dimension_numbers<[1], [0], [0], [1], [0, 0, 1, 1], [], []>} : vector<16x32xf32>, vector<32x64xf32>, vector<16x64xf32> -> vector<16x64xf32>
    %c2_19 = arith.constant 2 : index
    %c0_20 = arith.constant 0 : index
    %c0_21 = arith.constant 0 : index
    %32 = vector.load %arg2[%c2_19, %c0_20, %c0_21] : memref<3x1x64xf32, #tpu.memory_space<vmem>>, vector<1x1x64xf32>
    %33 = vector.shape_cast %32 : vector<1x1x64xf32> to vector<1x64xf32>
    %34 = vector.broadcast %33 : vector<1x64xf32> to vector<16x64xf32>
    %35 = arith.addf %31, %34 : vector<16x64xf32>
    %cst_22 = arith.constant 0.000000e+00 : f32
    %36 = vector.broadcast %cst_22 : f32 to vector<16x64xf32>
    %37 = arith.maximumf %35, %36 : vector<16x64xf32>
    %38 = vector.extract_strided_slice %37 {offsets = [0, 0], sizes = [16, 32], strides = [1, 1]} : vector<16x64xf32> to vector<16x32xf32>
    %39 = vector.extract_strided_slice %37 {offsets = [0, 32], sizes = [16, 32], strides = [1, 1]} : vector<16x64xf32> to vector<16x32xf32>
    %c0_23 = arith.constant 0 : index
    %c0_24 = arith.constant 0 : index
    %c0_25 = arith.constant 0 : index
    %40 = vector.load %arg3[%c0_23, %c0_24, %c0_25] : memref<6x32x128xf32, #tpu.memory_space<vmem>>, vector<1x32x128xf32>
    %41 = vector.shape_cast %40 : vector<1x32x128xf32> to vector<32x128xf32>
    %cst_26 = arith.constant dense<0.000000e+00> : vector<16x128xf32>
    %42 = tpu.matmul %12, %41, %cst_26 {dimension_numbers = #tpu.dot_dimension_numbers<[1], [0], [0], [1], [0, 0, 1, 1], [], []>} : vector<16x32xf32>, vector<32x128xf32>, vector<16x128xf32> -> vector<16x128xf32>
    %c0_27 = arith.constant 0 : index
    %c0_28 = arith.constant 0 : index
    %c0_29 = arith.constant 0 : index
    %43 = vector.load %arg4[%c0_27, %c0_28, %c0_29] : memref<6x1x128xf32, #tpu.memory_space<vmem>>, vector<1x1x128xf32>
    %44 = vector.shape_cast %43 : vector<1x1x128xf32> to vector<1x128xf32>
    %45 = vector.broadcast %44 : vector<1x128xf32> to vector<16x128xf32>
    %46 = arith.addf %42, %45 : vector<16x128xf32>
    %cst_30 = arith.constant 0.000000e+00 : f32
    %47 = vector.broadcast %cst_30 : f32 to vector<16x128xf32>
    %48 = arith.maximumf %46, %47 : vector<16x128xf32>
    %c1_31 = arith.constant 1 : index
    %c0_32 = arith.constant 0 : index
    %c0_33 = arith.constant 0 : index
    %49 = vector.load %arg3[%c1_31, %c0_32, %c0_33] : memref<6x32x128xf32, #tpu.memory_space<vmem>>, vector<1x32x128xf32>
    %50 = vector.shape_cast %49 : vector<1x32x128xf32> to vector<32x128xf32>
    %cst_34 = arith.constant dense<0.000000e+00> : vector<16x128xf32>
    %51 = tpu.matmul %13, %50, %cst_34 {dimension_numbers = #tpu.dot_dimension_numbers<[1], [0], [0], [1], [0, 0, 1, 1], [], []>} : vector<16x32xf32>, vector<32x128xf32>, vector<16x128xf32> -> vector<16x128xf32>
    %c1_35 = arith.constant 1 : index
    %c0_36 = arith.constant 0 : index
    %c0_37 = arith.constant 0 : index
    %52 = vector.load %arg4[%c1_35, %c0_36, %c0_37] : memref<6x1x128xf32, #tpu.memory_space<vmem>>, vector<1x1x128xf32>
    %53 = vector.shape_cast %52 : vector<1x1x128xf32> to vector<1x128xf32>
    %54 = vector.broadcast %53 : vector<1x128xf32> to vector<16x128xf32>
    %55 = arith.addf %51, %54 : vector<16x128xf32>
    %cst_38 = arith.constant 0.000000e+00 : f32
    %56 = vector.broadcast %cst_38 : f32 to vector<16x128xf32>
    %57 = arith.maximumf %55, %56 : vector<16x128xf32>
    %c2_39 = arith.constant 2 : index
    %c0_40 = arith.constant 0 : index
    %c0_41 = arith.constant 0 : index
    %58 = vector.load %arg3[%c2_39, %c0_40, %c0_41] : memref<6x32x128xf32, #tpu.memory_space<vmem>>, vector<1x32x128xf32>
    %59 = vector.shape_cast %58 : vector<1x32x128xf32> to vector<32x128xf32>
    %cst_42 = arith.constant dense<0.000000e+00> : vector<16x128xf32>
    %60 = tpu.matmul %25, %59, %cst_42 {dimension_numbers = #tpu.dot_dimension_numbers<[1], [0], [0], [1], [0, 0, 1, 1], [], []>} : vector<16x32xf32>, vector<32x128xf32>, vector<16x128xf32> -> vector<16x128xf32>
    %c2_43 = arith.constant 2 : index
    %c0_44 = arith.constant 0 : index
    %c0_45 = arith.constant 0 : index
    %61 = vector.load %arg4[%c2_43, %c0_44, %c0_45] : memref<6x1x128xf32, #tpu.memory_space<vmem>>, vector<1x1x128xf32>
    %62 = vector.shape_cast %61 : vector<1x1x128xf32> to vector<1x128xf32>
    %63 = vector.broadcast %62 : vector<1x128xf32> to vector<16x128xf32>
    %64 = arith.addf %60, %63 : vector<16x128xf32>
    %cst_46 = arith.constant 0.000000e+00 : f32
    %65 = vector.broadcast %cst_46 : f32 to vector<16x128xf32>
    %66 = arith.maximumf %64, %65 : vector<16x128xf32>
    %c3 = arith.constant 3 : index
    %c0_47 = arith.constant 0 : index
    %c0_48 = arith.constant 0 : index
    %67 = vector.load %arg3[%c3, %c0_47, %c0_48] : memref<6x32x128xf32, #tpu.memory_space<vmem>>, vector<1x32x128xf32>
    %68 = vector.shape_cast %67 : vector<1x32x128xf32> to vector<32x128xf32>
    %cst_49 = arith.constant dense<0.000000e+00> : vector<16x128xf32>
    %69 = tpu.matmul %26, %68, %cst_49 {dimension_numbers = #tpu.dot_dimension_numbers<[1], [0], [0], [1], [0, 0, 1, 1], [], []>} : vector<16x32xf32>, vector<32x128xf32>, vector<16x128xf32> -> vector<16x128xf32>
    %c3_50 = arith.constant 3 : index
    %c0_51 = arith.constant 0 : index
    %c0_52 = arith.constant 0 : index
    %70 = vector.load %arg4[%c3_50, %c0_51, %c0_52] : memref<6x1x128xf32, #tpu.memory_space<vmem>>, vector<1x1x128xf32>
    %71 = vector.shape_cast %70 : vector<1x1x128xf32> to vector<1x128xf32>
    %72 = vector.broadcast %71 : vector<1x128xf32> to vector<16x128xf32>
    %73 = arith.addf %69, %72 : vector<16x128xf32>
    %cst_53 = arith.constant 0.000000e+00 : f32
    %74 = vector.broadcast %cst_53 : f32 to vector<16x128xf32>
    %75 = arith.maximumf %73, %74 : vector<16x128xf32>
    %c4 = arith.constant 4 : index
    %c0_54 = arith.constant 0 : index
    %c0_55 = arith.constant 0 : index
    %76 = vector.load %arg3[%c4, %c0_54, %c0_55] : memref<6x32x128xf32, #tpu.memory_space<vmem>>, vector<1x32x128xf32>
    %77 = vector.shape_cast %76 : vector<1x32x128xf32> to vector<32x128xf32>
    %cst_56 = arith.constant dense<0.000000e+00> : vector<16x128xf32>
    %78 = tpu.matmul %38, %77, %cst_56 {dimension_numbers = #tpu.dot_dimension_numbers<[1], [0], [0], [1], [0, 0, 1, 1], [], []>} : vector<16x32xf32>, vector<32x128xf32>, vector<16x128xf32> -> vector<16x128xf32>
    %c4_57 = arith.constant 4 : index
    %c0_58 = arith.constant 0 : index
    %c0_59 = arith.constant 0 : index
    %79 = vector.load %arg4[%c4_57, %c0_58, %c0_59] : memref<6x1x128xf32, #tpu.memory_space<vmem>>, vector<1x1x128xf32>
    %80 = vector.shape_cast %79 : vector<1x1x128xf32> to vector<1x128xf32>
    %81 = vector.broadcast %80 : vector<1x128xf32> to vector<16x128xf32>
    %82 = arith.addf %78, %81 : vector<16x128xf32>
    %cst_60 = arith.constant 0.000000e+00 : f32
    %83 = vector.broadcast %cst_60 : f32 to vector<16x128xf32>
    %84 = arith.maximumf %82, %83 : vector<16x128xf32>
    %c5 = arith.constant 5 : index
    %c0_61 = arith.constant 0 : index
    %c0_62 = arith.constant 0 : index
    %85 = vector.load %arg3[%c5, %c0_61, %c0_62] : memref<6x32x128xf32, #tpu.memory_space<vmem>>, vector<1x32x128xf32>
    %86 = vector.shape_cast %85 : vector<1x32x128xf32> to vector<32x128xf32>
    %cst_63 = arith.constant dense<0.000000e+00> : vector<16x128xf32>
    %87 = tpu.matmul %39, %86, %cst_63 {dimension_numbers = #tpu.dot_dimension_numbers<[1], [0], [0], [1], [0, 0, 1, 1], [], []>} : vector<16x32xf32>, vector<32x128xf32>, vector<16x128xf32> -> vector<16x128xf32>
    %c5_64 = arith.constant 5 : index
    %c0_65 = arith.constant 0 : index
    %c0_66 = arith.constant 0 : index
    %88 = vector.load %arg4[%c5_64, %c0_65, %c0_66] : memref<6x1x128xf32, #tpu.memory_space<vmem>>, vector<1x1x128xf32>
    %89 = vector.shape_cast %88 : vector<1x1x128xf32> to vector<1x128xf32>
    %90 = vector.broadcast %89 : vector<1x128xf32> to vector<16x128xf32>
    %91 = arith.addf %87, %90 : vector<16x128xf32>
    %cst_67 = arith.constant 0.000000e+00 : f32
    %92 = vector.broadcast %cst_67 : f32 to vector<16x128xf32>
    %93 = arith.maximumf %91, %92 : vector<16x128xf32>
    %94 = vector.extract_strided_slice %0 {offsets = [0, 0, 0], sizes = [1, 16, 32], strides = [1, 1, 1]} : vector<3x16x32xf32> to vector<1x16x32xf32>
    %95 = vector.shape_cast %94 : vector<1x16x32xf32> to vector<16x32xf32>
    %c0_68 = arith.constant 0 : index
    %c0_69 = arith.constant 0 : index
    %c0_70 = arith.constant 0 : index
    %96 = vector.load %arg5[%c0_68, %c0_69, %c0_70] : memref<2x32x4xf32, #tpu.memory_space<vmem>>, vector<1x32x4xf32>
    %97 = vector.shape_cast %96 : vector<1x32x4xf32> to vector<32x4xf32>
    %cst_71 = arith.constant dense<0.000000e+00> : vector<16x4xf32>
    %98 = tpu.matmul %95, %97, %cst_71 {dimension_numbers = #tpu.dot_dimension_numbers<[1], [0], [0], [1], [0, 0, 1, 1], [], []>} : vector<16x32xf32>, vector<32x4xf32>, vector<16x4xf32> -> vector<16x4xf32>
    %c0_72 = arith.constant 0 : index
    %c0_73 = arith.constant 0 : index
    %c0_74 = arith.constant 0 : index
    %99 = vector.load %arg6[%c0_72, %c0_73, %c0_74] : memref<2x1x4xf32, #tpu.memory_space<vmem>>, vector<1x1x4xf32>
    %100 = vector.shape_cast %99 : vector<1x1x4xf32> to vector<1x4xf32>
    %101 = vector.broadcast %100 : vector<1x4xf32> to vector<16x4xf32>
    %102 = arith.addf %98, %101 : vector<16x4xf32>
    %cst_75 = arith.constant dense<0xFF800000> : vector<16xf32>
    %103 = vector.multi_reduction <maximumf>, %102, %cst_75 [1] : vector<16x4xf32> to vector<16xf32>
    %104 = vector.shape_cast %103 : vector<16xf32> to vector<16x1xf32>
    %105 = vector.broadcast %104 : vector<16x1xf32> to vector<16x4xf32>
    %106 = arith.subf %102, %105 : vector<16x4xf32>
    %107 = math.exp %106 : vector<16x4xf32>
    %cst_76 = arith.constant dense<0.000000e+00> : vector<16xf32>
    %108 = vector.multi_reduction <add>, %107, %cst_76 [1] : vector<16x4xf32> to vector<16xf32>
    %109 = vector.shape_cast %108 : vector<16xf32> to vector<16x1xf32>
    %110 = vector.broadcast %109 : vector<16x1xf32> to vector<16x4xf32>
    %111 = arith.divf %107, %110 : vector<16x4xf32>
    %112 = vector.extract_strided_slice %111 {offsets = [0, 0], sizes = [16, 1], strides = [1, 1]} : vector<16x4xf32> to vector<16x1xf32>
    %113 = vector.broadcast %112 : vector<16x1xf32> to vector<16x128xf32>
    %114 = arith.mulf %113, %48 : vector<16x128xf32>
    %115 = vector.extract_strided_slice %111 {offsets = [0, 1], sizes = [16, 1], strides = [1, 1]} : vector<16x4xf32> to vector<16x1xf32>
    %116 = vector.broadcast %115 : vector<16x1xf32> to vector<16x128xf32>
    %117 = arith.mulf %116, %57 : vector<16x128xf32>
    %118 = arith.addf %114, %117 : vector<16x128xf32>
    %119 = vector.extract_strided_slice %111 {offsets = [0, 2], sizes = [16, 1], strides = [1, 1]} : vector<16x4xf32> to vector<16x1xf32>
    %120 = vector.broadcast %119 : vector<16x1xf32> to vector<16x128xf32>
    %121 = arith.mulf %120, %84 : vector<16x128xf32>
    %122 = arith.addf %118, %121 : vector<16x128xf32>
    %123 = vector.extract_strided_slice %111 {offsets = [0, 3], sizes = [16, 1], strides = [1, 1]} : vector<16x4xf32> to vector<16x1xf32>
    %124 = vector.broadcast %123 : vector<16x1xf32> to vector<16x128xf32>
    %125 = arith.mulf %124, %93 : vector<16x128xf32>
    %126 = arith.addf %122, %125 : vector<16x128xf32>
    %c0_77 = arith.constant 0 : index
    %c0_78 = arith.constant 0 : index
    %c0_79 = arith.constant 0 : index
    %127 = vector.load %arg9[%c0_77, %c0_78, %c0_79] : memref<3x16x128xf32, #tpu.memory_space<vmem>>, vector<1x16x128xf32>
    %128 = vector.shape_cast %127 : vector<1x16x128xf32> to vector<16x128xf32>
    %129 = vector.shape_cast %126 : vector<16x128xf32> to vector<1x16x128xf32>
    tpu.vector_store %arg9[%c0_77, %c0_78, %c0_79], %129 {strides = array<i32>} : memref<3x16x128xf32, #tpu.memory_space<vmem>>, vector<1x16x128xf32>,
    %130 = vector.extract_strided_slice %0 {offsets = [1, 0, 0], sizes = [1, 16, 32], strides = [1, 1, 1]} : vector<3x16x32xf32> to vector<1x16x32xf32>
    %131 = vector.shape_cast %130 : vector<1x16x32xf32> to vector<16x32xf32>
    %c1_80 = arith.constant 1 : index
    %c0_81 = arith.constant 0 : index
    %c0_82 = arith.constant 0 : index
    %132 = vector.load %arg5[%c1_80, %c0_81, %c0_82] : memref<2x32x4xf32, #tpu.memory_space<vmem>>, vector<1x32x4xf32>
    %133 = vector.shape_cast %132 : vector<1x32x4xf32> to vector<32x4xf32>
    %cst_83 = arith.constant dense<0.000000e+00> : vector<16x4xf32>
    %134 = tpu.matmul %131, %133, %cst_83 {dimension_numbers = #tpu.dot_dimension_numbers<[1], [0], [0], [1], [0, 0, 1, 1], [], []>} : vector<16x32xf32>, vector<32x4xf32>, vector<16x4xf32> -> vector<16x4xf32>
    %c1_84 = arith.constant 1 : index
    %c0_85 = arith.constant 0 : index
    %c0_86 = arith.constant 0 : index
    %135 = vector.load %arg6[%c1_84, %c0_85, %c0_86] : memref<2x1x4xf32, #tpu.memory_space<vmem>>, vector<1x1x4xf32>
    %136 = vector.shape_cast %135 : vector<1x1x4xf32> to vector<1x4xf32>
    %137 = vector.broadcast %136 : vector<1x4xf32> to vector<16x4xf32>
    %138 = arith.addf %134, %137 : vector<16x4xf32>
    %cst_87 = arith.constant dense<0xFF800000> : vector<16xf32>
    %139 = vector.multi_reduction <maximumf>, %138, %cst_87 [1] : vector<16x4xf32> to vector<16xf32>
    %140 = vector.shape_cast %139 : vector<16xf32> to vector<16x1xf32>
    %141 = vector.broadcast %140 : vector<16x1xf32> to vector<16x4xf32>
    %142 = arith.subf %138, %141 : vector<16x4xf32>
    %143 = math.exp %142 : vector<16x4xf32>
    %cst_88 = arith.constant dense<0.000000e+00> : vector<16xf32>
    %144 = vector.multi_reduction <add>, %143, %cst_88 [1] : vector<16x4xf32> to vector<16xf32>
    %145 = vector.shape_cast %144 : vector<16xf32> to vector<16x1xf32>
    %146 = vector.broadcast %145 : vector<16x1xf32> to vector<16x4xf32>
    %147 = arith.divf %143, %146 : vector<16x4xf32>
    %148 = vector.extract_strided_slice %147 {offsets = [0, 0], sizes = [16, 1], strides = [1, 1]} : vector<16x4xf32> to vector<16x1xf32>
    %149 = vector.broadcast %148 : vector<16x1xf32> to vector<16x128xf32>
    %150 = arith.mulf %149, %66 : vector<16x128xf32>
    %151 = vector.extract_strided_slice %147 {offsets = [0, 1], sizes = [16, 1], strides = [1, 1]} : vector<16x4xf32> to vector<16x1xf32>
    %152 = vector.broadcast %151 : vector<16x1xf32> to vector<16x128xf32>
    %153 = arith.mulf %152, %75 : vector<16x128xf32>
    %154 = arith.addf %150, %153 : vector<16x128xf32>
    %155 = vector.extract_strided_slice %147 {offsets = [0, 2], sizes = [16, 1], strides = [1, 1]} : vector<16x4xf32> to vector<16x1xf32>
    %156 = vector.broadcast %155 : vector<16x1xf32> to vector<16x128xf32>
    %157 = arith.mulf %156, %84 : vector<16x128xf32>
    %158 = arith.addf %154, %157 : vector<16x128xf32>
    %159 = vector.extract_strided_slice %147 {offsets = [0, 3], sizes = [16, 1], strides = [1, 1]} : vector<16x4xf32> to vector<16x1xf32>
    %160 = vector.broadcast %159 : vector<16x1xf32> to vector<16x128xf32>
    %161 = arith.mulf %160, %93 : vector<16x128xf32>
    %162 = arith.addf %158, %161 : vector<16x128xf32>
    %c1_89 = arith.constant 1 : index
    %c0_90 = arith.constant 0 : index
    %c0_91 = arith.constant 0 : index
    %163 = vector.load %arg9[%c1_89, %c0_90, %c0_91] : memref<3x16x128xf32, #tpu.memory_space<vmem>>, vector<1x16x128xf32>
    %164 = vector.shape_cast %163 : vector<1x16x128xf32> to vector<16x128xf32>
    %165 = vector.shape_cast %162 : vector<16x128xf32> to vector<1x16x128xf32>
    tpu.vector_store %arg9[%c1_89, %c0_90, %c0_91], %165 {strides = array<i32>} : memref<3x16x128xf32, #tpu.memory_space<vmem>>, vector<1x16x128xf32>,
    %166 = vector.extract_strided_slice %0 {offsets = [2, 0, 0], sizes = [1, 16, 32], strides = [1, 1, 1]} : vector<3x16x32xf32> to vector<1x16x32xf32>
    %167 = vector.shape_cast %166 : vector<1x16x32xf32> to vector<16x32xf32>
    %c0_92 = arith.constant 0 : index
    %c0_93 = arith.constant 0 : index
    %c0_94 = arith.constant 0 : index
    %168 = vector.load %arg7[%c0_92, %c0_93, %c0_94] : memref<1x32x6xf32, #tpu.memory_space<vmem>>, vector<1x32x6xf32>
    %169 = vector.shape_cast %168 : vector<1x32x6xf32> to vector<32x6xf32>
    %cst_95 = arith.constant dense<0.000000e+00> : vector<16x6xf32>
    %170 = tpu.matmul %167, %169, %cst_95 {dimension_numbers = #tpu.dot_dimension_numbers<[1], [0], [0], [1], [0, 0, 1, 1], [], []>} : vector<16x32xf32>, vector<32x6xf32>, vector<16x6xf32> -> vector<16x6xf32>
    %c0_96 = arith.constant 0 : index
    %c0_97 = arith.constant 0 : index
    %c0_98 = arith.constant 0 : index
    %171 = vector.load %arg8[%c0_96, %c0_97, %c0_98] : memref<1x1x6xf32, #tpu.memory_space<vmem>>, vector<1x1x6xf32>
    %172 = vector.shape_cast %171 : vector<1x1x6xf32> to vector<1x6xf32>
    %173 = vector.broadcast %172 : vector<1x6xf32> to vector<16x6xf32>
    %174 = arith.addf %170, %173 : vector<16x6xf32>
    %cst_99 = arith.constant dense<0xFF800000> : vector<16xf32>
    %175 = vector.multi_reduction <maximumf>, %174, %cst_99 [1] : vector<16x6xf32> to vector<16xf32>
    %176 = vector.shape_cast %175 : vector<16xf32> to vector<16x1xf32>
    %177 = vector.broadcast %176 : vector<16x1xf32> to vector<16x6xf32>
    %178 = arith.subf %174, %177 : vector<16x6xf32>
    %179 = math.exp %178 : vector<16x6xf32>
    %cst_100 = arith.constant dense<0.000000e+00> : vector<16xf32>
    %180 = vector.multi_reduction <add>, %179, %cst_100 [1] : vector<16x6xf32> to vector<16xf32>
    %181 = vector.shape_cast %180 : vector<16xf32> to vector<16x1xf32>
    %182 = vector.broadcast %181 : vector<16x1xf32> to vector<16x6xf32>
    %183 = arith.divf %179, %182 : vector<16x6xf32>
    %184 = vector.extract_strided_slice %183 {offsets = [0, 0], sizes = [16, 1], strides = [1, 1]} : vector<16x6xf32> to vector<16x1xf32>
    %185 = vector.broadcast %184 : vector<16x1xf32> to vector<16x128xf32>
    %186 = arith.mulf %185, %48 : vector<16x128xf32>
    %187 = vector.extract_strided_slice %183 {offsets = [0, 1], sizes = [16, 1], strides = [1, 1]} : vector<16x6xf32> to vector<16x1xf32>
    %188 = vector.broadcast %187 : vector<16x1xf32> to vector<16x128xf32>
    %189 = arith.mulf %188, %57 : vector<16x128xf32>
    %190 = arith.addf %186, %189 : vector<16x128xf32>
    %191 = vector.extract_strided_slice %183 {offsets = [0, 2], sizes = [16, 1], strides = [1, 1]} : vector<16x6xf32> to vector<16x1xf32>
    %192 = vector.broadcast %191 : vector<16x1xf32> to vector<16x128xf32>
    %193 = arith.mulf %192, %66 : vector<16x128xf32>
    %194 = arith.addf %190, %193 : vector<16x128xf32>
    %195 = vector.extract_strided_slice %183 {offsets = [0, 3], sizes = [16, 1], strides = [1, 1]} : vector<16x6xf32> to vector<16x1xf32>
    %196 = vector.broadcast %195 : vector<16x1xf32> to vector<16x128xf32>
    %197 = arith.mulf %196, %75 : vector<16x128xf32>
    %198 = arith.addf %194, %197 : vector<16x128xf32>
    %199 = vector.extract_strided_slice %183 {offsets = [0, 4], sizes = [16, 1], strides = [1, 1]} : vector<16x6xf32> to vector<16x1xf32>
    %200 = vector.broadcast %199 : vector<16x1xf32> to vector<16x128xf32>
    %201 = arith.mulf %200, %84 : vector<16x128xf32>
    %202 = arith.addf %198, %201 : vector<16x128xf32>
    %203 = vector.extract_strided_slice %183 {offsets = [0, 5], sizes = [16, 1], strides = [1, 1]} : vector<16x6xf32> to vector<16x1xf32>
    %204 = vector.broadcast %203 : vector<16x1xf32> to vector<16x128xf32>
    %205 = arith.mulf %204, %93 : vector<16x128xf32>
    %206 = arith.addf %202, %205 : vector<16x128xf32>
    %c2_101 = arith.constant 2 : index
    %c0_102 = arith.constant 0 : index
    %c0_103 = arith.constant 0 : index
    %207 = vector.load %arg9[%c2_101, %c0_102, %c0_103] : memref<3x16x128xf32, #tpu.memory_space<vmem>>, vector<1x16x128xf32>
    %208 = vector.shape_cast %207 : vector<1x16x128xf32> to vector<16x128xf32>
    %209 = vector.shape_cast %206 : vector<16x128xf32> to vector<1x16x128xf32>
    tpu.vector_store %arg9[%c2_101, %c0_102, %c0_103], %209 {strides = array<i32>} : memref<3x16x128xf32, #tpu.memory_space<vmem>>, vector<1x16x128xf32>,
    return
  }
}

</mosaic_0001>

<llo_original>
// kernel: tpu_custom_call.1
$region0: #{tpu_custom_call.1}
  #allocation0 [shape = 'u32[]', space=smem, size = 0x4, offset = 0x4, fixed_abs, tag = 'smem constant byte address 0x4 - core index']
  #allocation1 [shape = 'u32[144,128]{1,0:T(1,128)}', space=vmem, size = 0x12000, scoped, tag = 'internal scratch']
  %s0 = inlined_call_operand.hbm [shape: f32[3,16,32], index: 0, kind: input, shape index: {}]
  %s1 = inlined_call_operand.vmem [shape: f32[3,32,64], index: 1, kind: input, shape index: {}]
  %s2 = inlined_call_operand.vmem [shape: f32[3,1,64], index: 2, kind: input, shape index: {}]
  %s3 = inlined_call_operand.hbm [shape: f32[6,32,128], index: 3, kind: input, shape index: {}]
  %s4 = inlined_call_operand.vmem [shape: f32[6,1,128], index: 4, kind: input, shape index: {}]
  %s5 = inlined_call_operand.vmem [shape: f32[2,32,4], index: 5, kind: input, shape index: {}]
  %s6 = inlined_call_operand.vmem [shape: f32[2,1,4], index: 6, kind: input, shape index: {}]
  %s7 = inlined_call_operand.vmem [shape: f32[1,32,6], index: 7, kind: input, shape index: {}]
  %s8 = inlined_call_operand.vmem [shape: f32[1,1,6], index: 8, kind: input, shape index: {}]
  %s9 = inlined_call_operand.hbm [shape: f32[3,16,128], index: 9, kind: output, shape index: {}]
  %s10 = sld [smem:[#allocation0]]
  $region54: #{tpu_custom_call.1} parent=0
    _
  %s12 = ssub.s32 1, %s10
  %s13 = scalar_select 0, %s12, %s10
  $region1: #{tpu_custom_call.1} parent=0
    #allocation2 [shape = 'u8[24576]{0}', space=vmem, size = 0x6000, scoped, tag = 'input window, operand 0, single buffered']
    #allocation3 [shape = 's32[1]{0}', space=sflag, size = 0x4, scoped, tag = 'scoped memory for tpu_custom_call.1']
    #allocation4 [shape = 's32[1]{0}', space=sflag, size = 0x4, scoped, tag = 'scoped memory for tpu_custom_call.1']
    #allocation5 [shape = 'u8[98304]{0}', space=vmem, size = 0x18000, scoped, tag = 'input window, operand 3, single buffered']
    #allocation6 [shape = 's32[1]{0}', space=sflag, size = 0x4, scoped, tag = 'scoped memory for tpu_custom_call.1']
    #allocation7 [shape = 'u8[24576]{0}', space=vmem, size = 0x6000, scoped, tag = 'output window, operand 0, single buffered']
    %14 = vsyncpa [#allocation3], 0
    %15 = vsyncpa [#allocation6], 0
    %16 = vsyncpa [#allocation4], 0
    // Predicated region
    $region2: #{tpu_custom_call.1} parent=1 // pred_check
      _
    $region3: #{tpu_custom_call.1} parent=1 // pred_check_branch
      %18 = sbr.rel (0) target = $region5
    $region4: #{tpu_custom_call.1} parent=1 // pred_region
      %s20 = ssub.s32 768, 768
      %21 = vsyncadd [#allocation3], %s20
      %s22 = sshll.u32 [#allocation2], 4
      %s23 = int_to_ptr.vmem [resolvable:$true] %s22
      %28 = dma.hbm_to_vmem [thread:$0]  %s0, 768, %s23, [#allocation3], 128, 128, 8
    $region5: #{tpu_custom_call.1} parent=1 // pred_fallthru
      _
    // Predicated region
    $region6: #{tpu_custom_call.1} parent=1 // pred_check
      _
    $region7: #{tpu_custom_call.1} parent=1 // pred_check_branch
      %30 = sbr.rel (0) target = $region9
    $region8: #{tpu_custom_call.1} parent=1 // pred_region
      _
    $region9: #{tpu_custom_call.1} parent=1 // pred_fallthru
      _
    // Predicated region
    $region10: #{tpu_custom_call.1} parent=1 // pred_check
      _
    $region11: #{tpu_custom_call.1} parent=1 // pred_check_branch
      %32 = sbr.rel (0) target = $region13
    $region12: #{tpu_custom_call.1} parent=1 // pred_region
      _
    $region13: #{tpu_custom_call.1} parent=1 // pred_fallthru
      _
    // Predicated region
    $region14: #{tpu_custom_call.1} parent=1 // pred_check
      _
    $region15: #{tpu_custom_call.1} parent=1 // pred_check_branch
      %34 = sbr.rel (0) target = $region17
    $region16: #{tpu_custom_call.1} parent=1 // pred_region
      %s36 = ssub.s32 3072, 3072
      %37 = vsyncadd [#allocation6], %s36
      %s38 = sshll.u32 [#allocation5], 4
      %s39 = int_to_ptr.vmem [resolvable:$true] %s38
      %44 = dma.hbm_to_vmem [thread:$0]  %s3, 3072, %s39, [#allocation6], 128, 128, 8
    $region17: #{tpu_custom_call.1} parent=1 // pred_fallthru
      _
    // Predicated region
    $region18: #{tpu_custom_call.1} parent=1 // pred_check
      _
    $region19: #{tpu_custom_call.1} parent=1 // pred_check_branch
      %46 = sbr.rel (0) target = $region21
    $region20: #{tpu_custom_call.1} parent=1 // pred_region
      _
    $region21: #{tpu_custom_call.1} parent=1 // pred_fallthru
      _
    // Predicated region
    $region22: #{tpu_custom_call.1} parent=1 // pred_check
      _
    $region23: #{tpu_custom_call.1} parent=1 // pred_check_branch
      %48 = sbr.rel (0) target = $region25
    $region24: #{tpu_custom_call.1} parent=1 // pred_region
      _
    $region25: #{tpu_custom_call.1} parent=1 // pred_fallthru
      _
    // Predicated region
    $region26: #{tpu_custom_call.1} parent=1 // pred_check
      _
    $region27: #{tpu_custom_call.1} parent=1 // pred_check_branch
      %50 = sbr.rel (0) target = $region29
    $region28: #{tpu_custom_call.1} parent=1 // pred_region
      _
    $region29: #{tpu_custom_call.1} parent=1 // pred_fallthru
      _
    // Predicated region
    $region30: #{tpu_custom_call.1} parent=1 // pred_check
      _
    $region31: #{tpu_custom_call.1} parent=1 // pred_check_branch
      %52 = sbr.rel (0) target = $region33
    $region32: #{tpu_custom_call.1} parent=1 // pred_region
      _
    $region33: #{tpu_custom_call.1} parent=1 // pred_fallthru
      _
    // Predicated region
    $region34: #{tpu_custom_call.1} parent=1 // pred_check
      _
    $region35: #{tpu_custom_call.1} parent=1 // pred_check_branch
      %54 = sbr.rel (0) target = $region37
    $region36: #{tpu_custom_call.1} parent=1 // pred_region
      _
    $region37: #{tpu_custom_call.1} parent=1 // pred_fallthru
      _
    // Predicated region
    $region38: #{tpu_custom_call.1} parent=1 // pred_check
      _
    $region39: #{tpu_custom_call.1} parent=1 // pred_check_branch
      %56 = sbr.rel (0) target = $region41
    $region40: #{tpu_custom_call.1} parent=1 // pred_region
      %57 = dma.done [#allocation3], 768
    $region41: #{tpu_custom_call.1} parent=1 // pred_fallthru
      _
    // Predicated region
    $region42: #{tpu_custom_call.1} parent=1 // pred_check
      _
    $region43: #{tpu_custom_call.1} parent=1 // pred_check_branch
      %59 = sbr.rel (0) target = $region45
    $region44: #{tpu_custom_call.1} parent=1 // pred_region
      %60 = dma.done [#allocation6], 3072
    $region45: #{tpu_custom_call.1} parent=1 // pred_fallthru
      _
    %v61 = vld [vmem:[#allocation2] sm:$0xff]
    %v62 = vld [vmem:[#allocation2 + $0x8] sm:$0xff]
    %v63 = vld [vmem:[#allocation2 + $0x10] sm:$0xff]
    %v64 = vld [vmem:[#allocation2 + $0x18] sm:$0xff]
    %v65 = vld [vmem:[#allocation2 + $0x20] sm:$0xff]
    %v66 = vld [vmem:[#allocation2 + $0x28] sm:$0xff]
    %v67 = vld [vmem:[%s1] sm:$0xff]
    %v68 = vld [vmem:[%s1 + $0x8] sm:$0xff]
    %v69 = vld [vmem:[%s1 + $0x10] sm:$0xff]
    %v70 = vld [vmem:[%s1 + $0x18] sm:$0xff]
    %v71 = vld [vmem:[%s2] sm:$0x1]
    %v73 = vlaneseq
    %v74 = vshrl.u32 %v73, 7
    %v75 = vsub.s32 0, %v74
    %v76 = vrot.slane %v71, %v75
    %vm78 = vcmask 261120
    %v80 = vsel %vm78, %v61, 0
    %v83 = vsel %vm78, %v62, 0
    %85 = vmatprep.subr.mxu0 0.0
    %86 = vmatpush1.msra.mxu0 %v67
    %87 = vmatprep.subr.mxu0 0.0
    %88 = vmatpush1.msra.mxu0 %v68
    %89 = vmatprep.subr.mxu0 0.0
    %90 = vmatpush1.msra.mxu0 %v69
    %91 = vmatprep.subr.mxu0 0.0
    %92 = vmatpush1.msra.mxu0 %v70
    %93 = vmatprep.subr.mxu0 0.0
    %94 = vmatpush1.msra.mxu0 0.0
    %95 = vmatprep.subr.mxu0 0.0
    %96 = vmatpush1.msra.mxu0 0.0
    %97 = vmatprep.subr.mxu0 0.0
    %98 = vmatpush1.msra.mxu0 0.0
    %99 = vmatprep.subr.mxu0 0.0
    %100 = vmatpush1.msra.mxu0 0.0
    %101 = vmatprep.subr.mxu0 0.0
    %102 = vmatpush1.msra.mxu0 0.0
    %103 = vmatprep.subr.mxu0 0.0
    %104 = vmatpush1.msra.mxu0 0.0
    %105 = vmatprep.subr.mxu0 0.0
    %106 = vmatpush1.msra.mxu0 0.0
    %107 = vmatprep.subr.mxu0 0.0
    %108 = vmatpush1.msra.mxu0 0.0
    %109 = vmatprep.subr.mxu0 0.0
    %110 = vmatpush1.msra.mxu0 0.0
    %111 = vmatprep.subr.mxu0 0.0
    %112 = vmatpush1.msra.mxu0 0.0
    %113 = vmatprep.subr.mxu0 0.0
    %114 = vmatpush1.msra.mxu0 0.0
    %115 = vmatprep.subr.mxu0 0.0
    %116 = vmatpush1.msra.mxu0 0.0
    %117 = vmatprep.subr.mxu0 0.0
    %118 = vmatpush1.msra.mxu0 0.0
    %119 = vmatprep.subr.mxu0 0.0
    %120 = vmatpush1.msra.mxu0 0.0
    %121 = vmatprep.subr.mxu0 0.0
    %122 = vmatpush1.msra.mxu0 0.0
    %123 = vmatprep.subr.mxu0 0.0
    %124 = vmatpush1.msra.mxu0 0.0
    %125 = vmatprep.subr.mxu0 0.0
    %126 = vmatpush1.msra.mxu0 0.0
    %127 = vmatprep.subr.mxu0 0.0
    %128 = vmatpush1.msra.mxu0 0.0
    %129 = vmatprep.subr.mxu0 0.0
    %130 = vmatpush1.msra.mxu0 0.0
    %131 = vmatprep.subr.mxu0 0.0
    %132 = vmatpush1.msra.mxu0 0.0
    %133 = vmatprep.subr.mxu0 0.0
    %134 = vmatpush1.msra.mxu0 0.0
    %135 = vmatprep.subr.mxu0 0.0
    %136 = vmatpush1.msra.mxu0 0.0
    %137 = vmatprep.subr.mxu0 0.0
    %138 = vmatpush1.msra.mxu0 0.0
    %139 = vmatprep.subr.mxu0 0.0
    %140 = vmatpush1.msra.mxu0 0.0
    %141 = vmatprep.subr.mxu0 0.0
    %142 = vmatpush1.msra.mxu0 0.0
    %143 = vmatprep.subr.mxu0 0.0
    %144 = vmatpush1.msra.mxu0 0.0
    %145 = vmatprep.subr.mxu0 0.0
    %146 = vmatpush1.msra.mxu0 0.0
    %147 = vmatprep.subr.mxu0 0.0
    %148 = vmatpush1.msra.mxu0 0.0
    %149 = vmatprep.mubr.f32.mxu0 0.0
    %150 = vmatmul.mubr.f32.gmra.mrb[0].mxu0 %v80
    %v151 = vpop.f32.mrb[0].mxu0
    %v152 = vadd.f32 %v76, %v151
    %v153 = vpop.f32.mrb[0].mxu0
    %154 = vmatprep.mubr.f32.mxu0 0.0
    %155 = vmatmul.mubr.f32.gmra.mrb[0].mxu0 %v83
    %v156 = vpop.f32.mrb[0].mxu0
    %v157 = vadd.f32 %v76, %v156
    %v158 = vpop.f32.mrb[0].mxu0
    %159 = vdwg.mxu0
    %v160 = vmax.f32 %v152, 0.0
    %v161 = vmax.f32 %v157, 0.0
    %s162 = scalar_lea.vmem %s1, 32
    %v163 = vld [vmem:[%s162] sm:$0xff]
    %v164 = vld [vmem:[%s162 + $0x8] sm:$0xff]
    %v165 = vld [vmem:[%s162 + $0x10] sm:$0xff]
    %v166 = vld [vmem:[%s162 + $0x18] sm:$0xff]
    %s167 = scalar_lea.vmem %s2, 1
    %v168 = vld [vmem:[%s167] sm:$0x1]
    %v170 = vlaneseq
    %v171 = vshrl.u32 %v170, 7
    %v172 = vsub.s32 0, %v171
    %v173 = vrot.slane %v168, %v172
    %v176 = vsel %vm78, %v63, 0
    %v179 = vsel %vm78, %v64, 0
    %181 = vmatprep.subr.mxu0 0.0
    %182 = vmatpush1.msra.mxu0 %v163
    %183 = vmatprep.subr.mxu0 0.0
    %184 = vmatpush1.msra.mxu0 %v164
    %185 = vmatprep.subr.mxu0 0.0
    %186 = vmatpush1.msra.mxu0 %v165
    %187 = vmatprep.subr.mxu0 0.0
    %188 = vmatpush1.msra.mxu0 %v166
    %189 = vmatprep.subr.mxu0 0.0
    %190 = vmatpush1.msra.mxu0 0.0
    %191 = vmatprep.subr.mxu0 0.0
    %192 = vmatpush1.msra.mxu0 0.0
    %193 = vmatprep.subr.mxu0 0.0
    %194 = vmatpush1.msra.mxu0 0.0
    %195 = vmatprep.subr.mxu0 0.0
    %196 = vmatpush1.msra.mxu0 0.0
    %197 = vmatprep.subr.mxu0 0.0
    %198 = vmatpush1.msra.mxu0 0.0
    %199 = vmatprep.subr.mxu0 0.0
    %200 = vmatpush1.msra.mxu0 0.0
    %201 = vmatprep.subr.mxu0 0.0
    %202 = vmatpush1.msra.mxu0 0.0
    %203 = vmatprep.subr.mxu0 0.0
    %204 = vmatpush1.msra.mxu0 0.0
    %205 = vmatprep.subr.mxu0 0.0
    %206 = vmatpush1.msra.mxu0 0.0
    %207 = vmatprep.subr.mxu0 0.0
    %208 = vmatpush1.msra.mxu0 0.0
    %209 = vmatprep.subr.mxu0 0.0
    %210 = vmatpush1.msra.mxu0 0.0
    %211 = vmatprep.subr.mxu0 0.0
    %212 = vmatpush1.msra.mxu0 0.0
    %213 = vmatprep.subr.mxu0 0.0
    %214 = vmatpush1.msra.mxu0 0.0
    %215 = vmatprep.subr.mxu0 0.0
    %216 = vmatpush1.msra.mxu0 0.0
    %217 = vmatprep.subr.mxu0 0.0
    %218 = vmatpush1.msra.mxu0 0.0
    %219 = vmatprep.subr.mxu0 0.0
    %220 = vmatpush1.msra.mxu0 0.0
    %221 = vmatprep.subr.mxu0 0.0
    %222 = vmatpush1.msra.mxu0 0.0
    %223 = vmatprep.subr.mxu0 0.0
    %224 = vmatpush1.msra.mxu0 0.0
    %225 = vmatprep.subr.mxu0 0.0
    %226 = vmatpush1.msra.mxu0 0.0
    %227 = vmatprep.subr.mxu0 0.0
    %228 = vmatpush1.msra.mxu0 0.0
    %229 = vmatprep.subr.mxu0 0.0
    %230 = vmatpush1.msra.mxu0 0.0
    %231 = vmatprep.subr.mxu0 0.0
    %232 = vmatpush1.msra.mxu0 0.0
    %233 = vmatprep.subr.mxu0 0.0
    %234 = vmatpush1.msra.mxu0 0.0
    %235 = vmatprep.subr.mxu0 0.0
    %236 = vmatpush1.msra.mxu0 0.0
    %237 = vmatprep.subr.mxu0 0.0
    %238 = vmatpush1.msra.mxu0 0.0
    %239 = vmatprep.subr.mxu0 0.0
    %240 = vmatpush1.msra.mxu0 0.0
    %241 = vmatprep.subr.mxu0 0.0
    %242 = vmatpush1.msra.mxu0 0.0
    %243 = vmatprep.subr.mxu0 0.0
    %244 = vmatpush1.msra.mxu0 0.0
    %245 = vmatprep.mubr.f32.mxu0 0.0
    %246 = vmatmul.mubr.f32.gmra.mrb[0].mxu0 %v176
    %v247 = vpop.f32.mrb[0].mxu0
    %v248 = vadd.f32 %v173, %v247
    %v249 = vpop.f32.mrb[0].mxu0
    %250 = vmatprep.mubr.f32.mxu0 0.0
    %251 = vmatmul.mubr.f32.gmra.mrb[0].mxu0 %v179
    %v252 = vpop.f32.mrb[0].mxu0
    %v253 = vadd.f32 %v173, %v252
    %v254 = vpop.f32.mrb[0].mxu0
    %255 = vdwg.mxu0
    %v256 = vmax.f32 %v248, 0.0
    %v257 = vmax.f32 %v253, 0.0
    %s258 = scalar_lea.vmem %s1, 64
    %v259 = vld [vmem:[%s258] sm:$0xff]
    %v260 = vld [vmem:[%s258 + $0x8] sm:$0xff]
    %v261 = vld [vmem:[%s258 + $0x10] sm:$0xff]
    %v262 = vld [vmem:[%s258 + $0x18] sm:$0xff]
    %s263 = scalar_lea.vmem %s2, 2
    %v264 = vld [vmem:[%s263] sm:$0x1]
    %v266 = vlaneseq
    %v267 = vshrl.u32 %v266, 7
    %v268 = vsub.s32 0, %v267
    %v269 = vrot.slane %v264, %v268
    %v272 = vsel %vm78, %v65, 0
    %v275 = vsel %vm78, %v66, 0
    %277 = vmatprep.subr.mxu0 0.0
    %278 = vmatpush1.msra.mxu0 %v259
    %279 = vmatprep.subr.mxu0 0.0
    %280 = vmatpush1.msra.mxu0 %v260
    %281 = vmatprep.subr.mxu0 0.0
    %282 = vmatpush1.msra.mxu0 %v261
    %283 = vmatprep.subr.mxu0 0.0
    %284 = vmatpush1.msra.mxu0 %v262
    %285 = vmatprep.subr.mxu0 0.0
    %286 = vmatpush1.msra.mxu0 0.0
    %287 = vmatprep.subr.mxu0 0.0
    %288 = vmatpush1.msra.mxu0 0.0
    %289 = vmatprep.subr.mxu0 0.0
    %290 = vmatpush1.msra.mxu0 0.0
    %291 = vmatprep.subr.mxu0 0.0
    %292 = vmatpush1.msra.mxu0 0.0
    %293 = vmatprep.subr.mxu0 0.0
    %294 = vmatpush1.msra.mxu0 0.0
    %295 = vmatprep.subr.mxu0 0.0
    %296 = vmatpush1.msra.mxu0 0.0
    %297 = vmatprep.subr.mxu0 0.0
    %298 = vmatpush1.msra.mxu0 0.0
    %299 = vmatprep.subr.mxu0 0.0
    %300 = vmatpush1.msra.mxu0 0.0
    %301 = vmatprep.subr.mxu0 0.0
    %302 = vmatpush1.msra.mxu0 0.0
    %303 = vmatprep.subr.mxu0 0.0
    %304 = vmatpush1.msra.mxu0 0.0
    %305 = vmatprep.subr.mxu0 0.0
    %306 = vmatpush1.msra.mxu0 0.0
    %307 = vmatprep.subr.mxu0 0.0
    %308 = vmatpush1.msra.mxu0 0.0
    %309 = vmatprep.subr.mxu0 0.0
    %310 = vmatpush1.msra.mxu0 0.0
    %311 = vmatprep.subr.mxu0 0.0
    %312 = vmatpush1.msra.mxu0 0.0
    %313 = vmatprep.subr.mxu0 0.0
    %314 = vmatpush1.msra.mxu0 0.0
    %315 = vmatprep.subr.mxu0 0.0
    %316 = vmatpush1.msra.mxu0 0.0
    %317 = vmatprep.subr.mxu0 0.0
    %318 = vmatpush1.msra.mxu0 0.0
    %319 = vmatprep.subr.mxu0 0.0
    %320 = vmatpush1.msra.mxu0 0.0
    %321 = vmatprep.subr.mxu0 0.0
    %322 = vmatpush1.msra.mxu0 0.0
    %323 = vmatprep.subr.mxu0 0.0
    %324 = vmatpush1.msra.mxu0 0.0
    %325 = vmatprep.subr.mxu0 0.0
    %326 = vmatpush1.msra.mxu0 0.0
    %327 = vmatprep.subr.mxu0 0.0
    %328 = vmatpush1.msra.mxu0 0.0
    %329 = vmatprep.subr.mxu0 0.0
    %330 = vmatpush1.msra.mxu0 0.0
    %331 = vmatprep.subr.mxu0 0.0
    %332 = vmatpush1.msra.mxu0 0.0
    %333 = vmatprep.subr.mxu0 0.0
    %334 = vmatpush1.msra.mxu0 0.0
    %335 = vmatprep.subr.mxu0 0.0
    %336 = vmatpush1.msra.mxu0 0.0
    %337 = vmatprep.subr.mxu0 0.0
    %338 = vmatpush1.msra.mxu0 0.0
    %339 = vmatprep.subr.mxu0 0.0
    %340 = vmatpush1.msra.mxu0 0.0
    %341 = vmatprep.mubr.f32.mxu0 0.0
    %342 = vmatmul.mubr.f32.gmra.mrb[0].mxu0 %v272
    %v343 = vpop.f32.mrb[0].mxu0
    %v344 = vadd.f32 %v269, %v343
    %v345 = vpop.f32.mrb[0].mxu0
    %346 = vmatprep.mubr.f32.mxu0 0.0
    %347 = vmatmul.mubr.f32.gmra.mrb[0].mxu0 %v275
    %v348 = vpop.f32.mrb[0].mxu0
    %v349 = vadd.f32 %v269, %v348
    %v350 = vpop.f32.mrb[0].mxu0
    %351 = vdwg.mxu0
    %v352 = vmax.f32 %v344, 0.0
    %v353 = vmax.f32 %v349, 0.0
    %v354 = vld [vmem:[#allocation5] sm:$0xff]
    %v355 = vld [vmem:[#allocation5 + $0x8] sm:$0xff]
    %v356 = vld [vmem:[#allocation5 + $0x10] sm:$0xff]
    %v357 = vld [vmem:[#allocation5 + $0x18] sm:$0xff]
    %v358 = vld [vmem:[%s4] sm:$0x1]
    %v360 = vlaneseq
    %v361 = vshrl.u32 %v360, 7
    %v362 = vsub.s32 0, %v361
    %v363 = vrot.slane %v358, %v362
    %v366 = vsel %vm78, %v160, 0
    %v369 = vsel %vm78, %v161, 0
    %371 = vmatprep.subr.mxu0 0.0
    %372 = vmatpush1.msra.mxu0 %v354
    %373 = vmatprep.subr.mxu0 0.0
    %374 = vmatpush1.msra.mxu0 %v355
    %375 = vmatprep.subr.mxu0 0.0
    %376 = vmatpush1.msra.mxu0 %v356
    %377 = vmatprep.subr.mxu0 0.0
    %378 = vmatpush1.msra.mxu0 %v357
    %379 = vmatprep.subr.mxu0 0.0
    %380 = vmatpush1.msra.mxu0 0.0
    %381 = vmatprep.subr.mxu0 0.0
    %382 = vmatpush1.msra.mxu0 0.0
    %383 = vmatprep.subr.mxu0 0.0
    %384 = vmatpush1.msra.mxu0 0.0
    %385 = vmatprep.subr.mxu0 0.0
    %386 = vmatpush1.msra.mxu0 0.0
    %387 = vmatprep.subr.mxu0 0.0
    %388 = vmatpush1.msra.mxu0 0.0
    %389 = vmatprep.subr.mxu0 0.0
    %390 = vmatpush1.msra.mxu0 0.0
    %391 = vmatprep.subr.mxu0 0.0
    %392 = vmatpush1.msra.mxu0 0.0
    %393 = vmatprep.subr.mxu0 0.0
    %394 = vmatpush1.msra.mxu0 0.0
    %395 = vmatprep.subr.mxu0 0.0
    %396 = vmatpush1.msra.mxu0 0.0
    %397 = vmatprep.subr.mxu0 0.0
    %398 = vmatpush1.msra.mxu0 0.0
    %399 = vmatprep.subr.mxu0 0.0
    %400 = vmatpush1.msra.mxu0 0.0
    %401 = vmatprep.subr.mxu0 0.0
    %402 = vmatpush1.msra.mxu0 0.0
    %403 = vmatprep.subr.mxu0 0.0
    %404 = vmatpush1.msra.mxu0 0.0
    %405 = vmatprep.subr.mxu0 0.0
    %406 = vmatpush1.msra.mxu0 0.0
    %407 = vmatprep.subr.mxu0 0.0
    %408 = vmatpush1.msra.mxu0 0.0
    %409 = vmatprep.subr.mxu0 0.0
    %410 = vmatpush1.msra.mxu0 0.0
    %411 = vmatprep.subr.mxu0 0.0
    %412 = vmatpush1.msra.mxu0 0.0
    %413 = vmatprep.subr.mxu0 0.0
    %414 = vmatpush1.msra.mxu0 0.0
    %415 = vmatprep.subr.mxu0 0.0
    %416 = vmatpush1.msra.mxu0 0.0
    %417 = vmatprep.subr.mxu0 0.0
    %418 = vmatpush1.msra.mxu0 0.0
    %419 = vmatprep.subr.mxu0 0.0
    %420 = vmatpush1.msra.mxu0 0.0
    %421 = vmatprep.subr.mxu0 0.0
    %422 = vmatpush1.msra.mxu0 0.0
    %423 = vmatprep.subr.mxu0 0.0
    %424 = vmatpush1.msra.mxu0 0.0
    %425 = vmatprep.subr.mxu0 0.0
    %426 = vmatpush1.msra.mxu0 0.0
    %427 = vmatprep.subr.mxu0 0.0
    %428 = vmatpush1.msra.mxu0 0.0
    %429 = vmatprep.subr.mxu0 0.0
    %430 = vmatpush1.msra.mxu0 0.0
    %431 = vmatprep.subr.mxu0 0.0
    %432 = vmatpush1.msra.mxu0 0.0
    %433 = vmatprep.subr.mxu0 0.0
    %434 = vmatpush1.msra.mxu0 0.0
    %435 = vmatprep.mubr.f32.mxu0 0.0
    %436 = vmatmul.mubr.f32.gmra.mrb[0].mxu0 %v366
    %v437 = vpop.f32.mrb[0].mxu0
    %v438 = vadd.f32 %v363, %v437
    %v439 = vpop.f32.mrb[0].mxu0
    %440 = vmatprep.mubr.f32.mxu0 0.0
    %441 = vmatmul.mubr.f32.gmra.mrb[0].mxu0 %v369
    %v442 = vpop.f32.mrb[0].mxu0
    %v443 = vadd.f32 %v363, %v442
    %v444 = vpop.f32.mrb[0].mxu0
    %445 = vdwg.mxu0
    %v446 = vmax.f32 %v438, 0.0
    %v447 = vmax.f32 %v443, 0.0
    %s448 = scalar_lea.vmem [#allocation5], 32
    %v449 = vld [vmem:[%s448] sm:$0xff]
    %v450 = vld [vmem:[%s448 + $0x8] sm:$0xff]
    %v451 = vld [vmem:[%s448 + $0x10] sm:$0xff]
    %v452 = vld [vmem:[%s448 + $0x18] sm:$0xff]
    %s453 = scalar_lea.vmem %s4, 1
    %v454 = vld [vmem:[%s453] sm:$0x1]
    %v456 = vlaneseq
    %v457 = vshrl.u32 %v456, 7
    %v458 = vsub.s32 0, %v457
    %v459 = vrot.slane %v454, %v458
    %461 = vrot.lane.b32.xlu0 %v160, 96
    %v462 = vpop.permute.xlu0 %461
    %463 = vrot.lane.b32.xlu0 %v161, 96
    %v464 = vpop.permute.xlu0 %463
    %v465 = vsel %vm78, %v462, 0
    %v467 = vsel %vm78, %v464, 0
    %469 = vmatprep.subr.mxu0 0.0
    %470 = vmatpush1.msra.mxu0 %v449
    %471 = vmatprep.subr.mxu0 0.0
    %472 = vmatpush1.msra.mxu0 %v450
    %473 = vmatprep.subr.mxu0 0.0
    %474 = vmatpush1.msra.mxu0 %v451
    %475 = vmatprep.subr.mxu0 0.0
    %476 = vmatpush1.msra.mxu0 %v452
    %477 = vmatprep.subr.mxu0 0.0
    %478 = vmatpush1.msra.mxu0 0.0
    %479 = vmatprep.subr.mxu0 0.0
    %480 = vmatpush1.msra.mxu0 0.0
    %481 = vmatprep.subr.mxu0 0.0
    %482 = vmatpush1.msra.mxu0 0.0
    %483 = vmatprep.subr.mxu0 0.0
    %484 = vmatpush1.msra.mxu0 0.0
    %485 = vmatprep.subr.mxu0 0.0
    %486 = vmatpush1.msra.mxu0 0.0
    %487 = vmatprep.subr.mxu0 0.0
    %488 = vmatpush1.msra.mxu0 0.0
    %489 = vmatprep.subr.mxu0 0.0
    %490 = vmatpush1.msra.mxu0 0.0
    %491 = vmatprep.subr.mxu0 0.0
    %492 = vmatpush1.msra.mxu0 0.0
    %493 = vmatprep.subr.mxu0 0.0
    %494 = vmatpush1.msra.mxu0 0.0
    %495 = vmatprep.subr.mxu0 0.0
    %496 = vmatpush1.msra.mxu0 0.0
    %497 = vmatprep.subr.mxu0 0.0
    %498 = vmatpush1.msra.mxu0 0.0
    %499 = vmatprep.subr.mxu0 0.0
    %500 = vmatpush1.msra.mxu0 0.0
    %501 = vmatprep.subr.mxu0 0.0
    %502 = vmatpush1.msra.mxu0 0.0
    %503 = vmatprep.subr.mxu0 0.0
    %504 = vmatpush1.msra.mxu0 0.0
    %505 = vmatprep.subr.mxu0 0.0
    %506 = vmatpush1.msra.mxu0 0.0
    %507 = vmatprep.subr.mxu0 0.0
    %508 = vmatpush1.msra.mxu0 0.0
    %509 = vmatprep.subr.mxu0 0.0
    %510 = vmatpush1.msra.mxu0 0.0
    %511 = vmatprep.subr.mxu0 0.0
    %512 = vmatpush1.msra.mxu0 0.0
    %513 = vmatprep.subr.mxu0 0.0
    %514 = vmatpush1.msra.mxu0 0.0
    %515 = vmatprep.subr.mxu0 0.0
    %516 = vmatpush1.msra.mxu0 0.0
    %517 = vmatprep.subr.mxu0 0.0
    %518 = vmatpush1.msra.mxu0 0.0
    %519 = vmatprep.subr.mxu0 0.0
    %520 = vmatpush1.msra.mxu0 0.0
    %521 = vmatprep.subr.mxu0 0.0
    %522 = vmatpush1.msra.mxu0 0.0
    %523 = vmatprep.subr.mxu0 0.0
    %524 = vmatpush1.msra.mxu0 0.0
    %525 = vmatprep.subr.mxu0 0.0
    %526 = vmatpush1.msra.mxu0 0.0
    %527 = vmatprep.subr.mxu0 0.0
    %528 = vmatpush1.msra.mxu0 0.0
    %529 = vmatprep.subr.mxu0 0.0
    %530 = vmatpush1.msra.mxu0 0.0
    %531 = vmatprep.subr.mxu0 0.0
    %532 = vmatpush1.msra.mxu0 0.0
    %533 = vmatprep.mubr.f32.mxu0 0.0
    %534 = vmatmul.mubr.f32.gmra.mrb[0].mxu0 %v465
    %v535 = vpop.f32.mrb[0].mxu0
    %v536 = vadd.f32 %v459, %v535
    %v537 = vpop.f32.mrb[0].mxu0
    %538 = vmatprep.mubr.f32.mxu0 0.0
    %539 = vmatmul.mubr.f32.gmra.mrb[0].mxu0 %v467
    %v540 = vpop.f32.mrb[0].mxu0
    %v541 = vadd.f32 %v459, %v540
    %v542 = vpop.f32.mrb[0].mxu0
    %543 = vdwg.mxu0
    %v544 = vmax.f32 %v536, 0.0
    %v545 = vmax.f32 %v541, 0.0
    %s546 = scalar_lea.vmem [#allocation5], 64
    %v547 = vld [vmem:[%s546] sm:$0xff]
    %v548 = vld [vmem:[%s546 + $0x8] sm:$0xff]
    %v549 = vld [vmem:[%s546 + $0x10] sm:$0xff]
    %v550 = vld [vmem:[%s546 + $0x18] sm:$0xff]
    %s551 = scalar_lea.vmem %s4, 2
    %v552 = vld [vmem:[%s551] sm:$0x1]
    %v554 = vlaneseq
    %v555 = vshrl.u32 %v554, 7
    %v556 = vsub.s32 0, %v555
    %v557 = vrot.slane %v552, %v556
    %v560 = vsel %vm78, %v256, 0
    %v563 = vsel %vm78, %v257, 0
    %565 = vmatprep.subr.mxu0 0.0
    %566 = vmatpush1.msra.mxu0 %v547
    %567 = vmatprep.subr.mxu0 0.0
    %568 = vmatpush1.msra.mxu0 %v548
    %569 = vmatprep.subr.mxu0 0.0
    %570 = vmatpush1.msra.mxu0 %v549
    %571 = vmatprep.subr.mxu0 0.0
    %572 = vmatpush1.msra.mxu0 %v550
    %573 = vmatprep.subr.mxu0 0.0
    %574 = vmatpush1.msra.mxu0 0.0
    %575 = vmatprep.subr.mxu0 0.0
    %576 = vmatpush1.msra.mxu0 0.0
    %577 = vmatprep.subr.mxu0 0.0
    %578 = vmatpush1.msra.mxu0 0.0
    %579 = vmatprep.subr.mxu0 0.0
    %580 = vmatpush1.msra.mxu0 0.0
    %581 = vmatprep.subr.mxu0 0.0
    %582 = vmatpush1.msra.mxu0 0.0
    %583 = vmatprep.subr.mxu0 0.0
    %584 = vmatpush1.msra.mxu0 0.0
    %585 = vmatprep.subr.mxu0 0.0
    %586 = vmatpush1.msra.mxu0 0.0
    %587 = vmatprep.subr.mxu0 0.0
    %588 = vmatpush1.msra.mxu0 0.0
    %589 = vmatprep.subr.mxu0 0.0
    %590 = vmatpush1.msra.mxu0 0.0
    %591 = vmatprep.subr.mxu0 0.0
    %592 = vmatpush1.msra.mxu0 0.0
    %593 = vmatprep.subr.mxu0 0.0
    %594 = vmatpush1.msra.mxu0 0.0
    %595 = vmatprep.subr.mxu0 0.0
    %596 = vmatpush1.msra.mxu0 0.0
    %597 = vmatprep.subr.mxu0 0.0
    %598 = vmatpush1.msra.mxu0 0.0
    %599 = vmatprep.subr.mxu0 0.0
    %600 = vmatpush1.msra.mxu0 0.0
    %601 = vmatprep.subr.mxu0 0.0
    %602 = vmatpush1.msra.mxu0 0.0
    %603 = vmatprep.subr.mxu0 0.0
    %604 = vmatpush1.msra.mxu0 0.0
    %605 = vmatprep.subr.mxu0 0.0
    %606 = vmatpush1.msra.mxu0 0.0
    %607 = vmatprep.subr.mxu0 0.0
    %608 = vmatpush1.msra.mxu0 0.0
    %609 = vmatprep.subr.mxu0 0.0
    %610 = vmatpush1.msra.mxu0 0.0
    %611 = vmatprep.subr.mxu0 0.0
    %612 = vmatpush1.msra.mxu0 0.0
    %613 = vmatprep.subr.mxu0 0.0
    %614 = vmatpush1.msra.mxu0 0.0
    %615 = vmatprep.subr.mxu0 0.0
    %616 = vmatpush1.msra.mxu0 0.0
    %617 = vmatprep.subr.mxu0 0.0
    %618 = vmatpush1.msra.mxu0 0.0
    %619 = vmatprep.subr.mxu0 0.0
    %620 = vmatpush1.msra.mxu0 0.0
    %621 = vmatprep.subr.mxu0 0.0
    %622 = vmatpush1.msra.mxu0 0.0
    %623 = vmatprep.subr.mxu0 0.0
    %624 = vmatpush1.msra.mxu0 0.0
    %625 = vmatprep.subr.mxu0 0.0
    %626 = vmatpush1.msra.mxu0 0.0
    %627 = vmatprep.subr.mxu0 0.0
    %628 = vmatpush1.msra.mxu0 0.0
    %629 = vmatprep.mubr.f32.mxu0 0.0
    %630 = vmatmul.mubr.f32.gmra.mrb[0].mxu0 %v560
    %v631 = vpop.f32.mrb[0].mxu0
    %v632 = vadd.f32 %v557, %v631
    %v633 = vpop.f32.mrb[0].mxu0
    %634 = vmatprep.mubr.f32.mxu0 0.0
    %635 = vmatmul.mubr.f32.gmra.mrb[0].mxu0 %v563
    %v636 = vpop.f32.mrb[0].mxu0
    %v637 = vadd.f32 %v557, %v636
    %v638 = vpop.f32.mrb[0].mxu0
    %639 = vdwg.mxu0
    %v640 = vmax.f32 %v632, 0.0
    %v641 = vmax.f32 %v637, 0.0
    %s642 = scalar_lea.vmem [#allocation5], 96
    %v643 = vld [vmem:[%s642] sm:$0xff]
    %v644 = vld [vmem:[%s642 + $0x8] sm:$0xff]
    %v645 = vld [vmem:[%s642 + $0x10] sm:$0xff]
    %v646 = vld [vmem:[%s642 + $0x18] sm:$0xff]
    %s647 = scalar_lea.vmem %s4, 3
    %v648 = vld [vmem:[%s647] sm:$0x1]
    %v650 = vlaneseq
    %v651 = vshrl.u32 %v650, 7
    %v652 = vsub.s32 0, %v651
    %v653 = vrot.slane %v648, %v652
    %655 = vrot.lane.b32.xlu0 %v256, 96
    %v656 = vpop.permute.xlu0 %655
    %657 = vrot.lane.b32.xlu0 %v257, 96
    %v658 = vpop.permute.xlu0 %657
    %v659 = vsel %vm78, %v656, 0
    %v661 = vsel %vm78, %v658, 0
    %663 = vmatprep.subr.mxu0 0.0
    %664 = vmatpush1.msra.mxu0 %v643
    %665 = vmatprep.subr.mxu0 0.0
    %666 = vmatpush1.msra.mxu0 %v644
    %667 = vmatprep.subr.mxu0 0.0
    %668 = vmatpush1.msra.mxu0 %v645
    %669 = vmatprep.subr.mxu0 0.0
    %670 = vmatpush1.msra.mxu0 %v646
    %671 = vmatprep.subr.mxu0 0.0
    %672 = vmatpush1.msra.mxu0 0.0
    %673 = vmatprep.subr.mxu0 0.0
    %674 = vmatpush1.msra.mxu0 0.0
    %675 = vmatprep.subr.mxu0 0.0
    %676 = vmatpush1.msra.mxu0 0.0
    %677 = vmatprep.subr.mxu0 0.0
    %678 = vmatpush1.msra.mxu0 0.0
    %679 = vmatprep.subr.mxu0 0.0
    %680 = vmatpush1.msra.mxu0 0.0
    %681 = vmatprep.subr.mxu0 0.0
    %682 = vmatpush1.msra.mxu0 0.0
    %683 = vmatprep.subr.mxu0 0.0
    %684 = vmatpush1.msra.mxu0 0.0
    %685 = vmatprep.subr.mxu0 0.0
    %686 = vmatpush1.msra.mxu0 0.0
    %687 = vmatprep.subr.mxu0 0.0
    %688 = vmatpush1.msra.mxu0 0.0
    %689 = vmatprep.subr.mxu0 0.0
    %690 = vmatpush1.msra.mxu0 0.0
    %691 = vmatprep.subr.mxu0 0.0
    %692 = vmatpush1.msra.mxu0 0.0
    %693 = vmatprep.subr.mxu0 0.0
    %694 = vmatpush1.msra.mxu0 0.0
    %695 = vmatprep.subr.mxu0 0.0
    %696 = vmatpush1.msra.mxu0 0.0
    %697 = vmatprep.subr.mxu0 0.0
    %698 = vmatpush1.msra.mxu0 0.0
    %699 = vmatprep.subr.mxu0 0.0
    %700 = vmatpush1.msra.mxu0 0.0
    %701 = vmatprep.subr.mxu0 0.0
    %702 = vmatpush1.msra.mxu0 0.0
    %703 = vmatprep.subr.mxu0 0.0
    %704 = vmatpush1.msra.mxu0 0.0
    %705 = vmatprep.subr.mxu0 0.0
    %706 = vmatpush1.msra.mxu0 0.0
    %707 = vmatprep.subr.mxu0 0.0
    %708 = vmatpush1.msra.mxu0 0.0
    %709 = vmatprep.subr.mxu0 0.0
    %710 = vmatpush1.msra.mxu0 0.0
    %711 = vmatprep.subr.mxu0 0.0
    %712 = vmatpush1.msra.mxu0 0.0
    %713 = vmatprep.subr.mxu0 0.0
    %714 = vmatpush1.msra.mxu0 0.0
    %715 = vmatprep.subr.mxu0 0.0
    %716 = vmatpush1.msra.mxu0 0.0
    %717 = vmatprep.subr.mxu0 0.0
    %718 = vmatpush1.msra.mxu0 0.0
    %719 = vmatprep.subr.mxu0 0.0
    %720 = vmatpush1.msra.mxu0 0.0
    %721 = vmatprep.subr.mxu0 0.0
    %722 = vmatpush1.msra.mxu0 0.0
    %723 = vmatprep.subr.mxu0 0.0
    %724 = vmatpush1.msra.mxu0 0.0
    %725 = vmatprep.subr.mxu0 0.0
    %726 = vmatpush1.msra.mxu0 0.0
    %727 = vmatprep.mubr.f32.mxu0 0.0
    %728 = vmatmul.mubr.f32.gmra.mrb[0].mxu0 %v659
    %v729 = vpop.f32.mrb[0].mxu0
    %v730 = vadd.f32 %v653, %v729
    %v731 = vpop.f32.mrb[0].mxu0
    %732 = vmatprep.mubr.f32.mxu0 0.0
    %733 = vmatmul.mubr.f32.gmra.mrb[0].mxu0 %v661
    %v734 = vpop.f32.mrb[0].mxu0
    %v735 = vadd.f32 %v653, %v734
    %v736 = vpop.f32.mrb[0].mxu0
    %737 = vdwg.mxu0
    %v738 = vmax.f32 %v730, 0.0
    %v739 = vmax.f32 %v735, 0.0
    %s740 = scalar_lea.vmem [#allocation5], 128
    %v741 = vld [vmem:[%s740] sm:$0xff]
    %v742 = vld [vmem:[%s740 + $0x8] sm:$0xff]
    %v743 = vld [vmem:[%s740 + $0x10] sm:$0xff]
    %v744 = vld [vmem:[%s740 + $0x18] sm:$0xff]
    %s745 = scalar_lea.vmem %s4, 4
    %v746 = vld [vmem:[%s745] sm:$0x1]
    %v748 = vlaneseq
    %v749 = vshrl.u32 %v748, 7
    %v750 = vsub.s32 0, %v749
    %v751 = vrot.slane %v746, %v750
    %v754 = vsel %vm78, %v352, 0
    %v757 = vsel %vm78, %v353, 0
    %759 = vmatprep.subr.mxu0 0.0
    %760 = vmatpush1.msra.mxu0 %v741
    %761 = vmatprep.subr.mxu0 0.0
    %762 = vmatpush1.msra.mxu0 %v742
    %763 = vmatprep.subr.mxu0 0.0
    %764 = vmatpush1.msra.mxu0 %v743
    %765 = vmatprep.subr.mxu0 0.0
    %766 = vmatpush1.msra.mxu0 %v744
    %767 = vmatprep.subr.mxu0 0.0
    %768 = vmatpush1.msra.mxu0 0.0
    %769 = vmatprep.subr.mxu0 0.0
    %770 = vmatpush1.msra.mxu0 0.0
    %771 = vmatprep.subr.mxu0 0.0
    %772 = vmatpush1.msra.mxu0 0.0
    %773 = vmatprep.subr.mxu0 0.0
    %774 = vmatpush1.msra.mxu0 0.0
    %775 = vmatprep.subr.mxu0 0.0
    %776 = vmatpush1.msra.mxu0 0.0
    %777 = vmatprep.subr.mxu0 0.0
    %778 = vmatpush1.msra.mxu0 0.0
    %779 = vmatprep.subr.mxu0 0.0
    %780 = vmatpush1.msra.mxu0 0.0
    %781 = vmatprep.subr.mxu0 0.0
    %782 = vmatpush1.msra.mxu0 0.0
    %783 = vmatprep.subr.mxu0 0.0
    %784 = vmatpush1.msra.mxu0 0.0
    %785 = vmatprep.subr.mxu0 0.0
    %786 = vmatpush1.msra.mxu0 0.0
    %787 = vmatprep.subr.mxu0 0.0
    %788 = vmatpush1.msra.mxu0 0.0
    %789 = vmatprep.subr.mxu0 0.0
    %790 = vmatpush1.msra.mxu0 0.0
    %791 = vmatprep.subr.mxu0 0.0
    %792 = vmatpush1.msra.mxu0 0.0
    %793 = vmatprep.subr.mxu0 0.0
    %794 = vmatpush1.msra.mxu0 0.0
    %795 = vmatprep.subr.mxu0 0.0
    %796 = vmatpush1.msra.mxu0 0.0
    %797 = vmatprep.subr.mxu0 0.0
    %798 = vmatpush1.msra.mxu0 0.0
    %799 = vmatprep.subr.mxu0 0.0
    %800 = vmatpush1.msra.mxu0 0.0
    %801 = vmatprep.subr.mxu0 0.0
    %802 = vmatpush1.msra.mxu0 0.0
    %803 = vmatprep.subr.mxu0 0.0
    %804 = vmatpush1.msra.mxu0 0.0
    %805 = vmatprep.subr.mxu0 0.0
    %806 = vmatpush1.msra.mxu0 0.0
    %807 = vmatprep.subr.mxu0 0.0
    %808 = vmatpush1.msra.mxu0 0.0
    %809 = vmatprep.subr.mxu0 0.0
    %810 = vmatpush1.msra.mxu0 0.0
    %811 = vmatprep.subr.mxu0 0.0
    %812 = vmatpush1.msra.mxu0 0.0
    %813 = vmatprep.subr.mxu0 0.0
    %814 = vmatpush1.msra.mxu0 0.0
    %815 = vmatprep.subr.mxu0 0.0
    %816 = vmatpush1.msra.mxu0 0.0
    %817 = vmatprep.subr.mxu0 0.0
    %818 = vmatpush1.msra.mxu0 0.0
    %819 = vmatprep.subr.mxu0 0.0
    %820 = vmatpush1.msra.mxu0 0.0
    %821 = vmatprep.subr.mxu0 0.0
    %822 = vmatpush1.msra.mxu0 0.0
    %823 = vmatprep.mubr.f32.mxu0 0.0
    %824 = vmatmul.mubr.f32.gmra.mrb[0].mxu0 %v754
    %v825 = vpop.f32.mrb[0].mxu0
    %v826 = vadd.f32 %v751, %v825
    %v827 = vpop.f32.mrb[0].mxu0
    %828 = vmatprep.mubr.f32.mxu0 0.0
    %829 = vmatmul.mubr.f32.gmra.mrb[0].mxu0 %v757
    %v830 = vpop.f32.mrb[0].mxu0
    %v831 = vadd.f32 %v751, %v830
    %v832 = vpop.f32.mrb[0].mxu0
    %833 = vdwg.mxu0
    %v834 = vmax.f32 %v826, 0.0
    %v835 = vmax.f32 %v831, 0.0
    %s836 = scalar_lea.vmem [#allocation5], 160
    %v837 = vld [vmem:[%s836] sm:$0xff]
    %v838 = vld [vmem:[%s836 + $0x8] sm:$0xff]
    %v839 = vld [vmem:[%s836 + $0x10] sm:$0xff]
    %v840 = vld [vmem:[%s836 + $0x18] sm:$0xff]
    %s841 = scalar_lea.vmem %s4, 5
    %v842 = vld [vmem:[%s841] sm:$0x1]
    %v844 = vlaneseq
    %v845 = vshrl.u32 %v844, 7
    %v846 = vsub.s32 0, %v845
    %v847 = vrot.slane %v842, %v846
    %849 = vrot.lane.b32.xlu0 %v352, 96
    %v850 = vpop.permute.xlu0 %849
    %851 = vrot.lane.b32.xlu0 %v353, 96
    %v852 = vpop.permute.xlu0 %851
    %v853 = vsel %vm78, %v850, 0
    %v855 = vsel %vm78, %v852, 0
    %857 = vmatprep.subr.mxu0 0.0
    %858 = vmatpush1.msra.mxu0 %v837
    %859 = vmatprep.subr.mxu0 0.0
    %860 = vmatpush1.msra.mxu0 %v838
    %861 = vmatprep.subr.mxu0 0.0
    %862 = vmatpush1.msra.mxu0 %v839
    %863 = vmatprep.subr.mxu0 0.0
    %864 = vmatpush1.msra.mxu0 %v840
    %865 = vmatprep.subr.mxu0 0.0
    %866 = vmatpush1.msra.mxu0 0.0
    %867 = vmatprep.subr.mxu0 0.0
    %868 = vmatpush1.msra.mxu0 0.0
    %869 = vmatprep.subr.mxu0 0.0
    %870 = vmatpush1.msra.mxu0 0.0
    %871 = vmatprep.subr.mxu0 0.0
    %872 = vmatpush1.msra.mxu0 0.0
    %873 = vmatprep.subr.mxu0 0.0
    %874 = vmatpush1.msra.mxu0 0.0
    %875 = vmatprep.subr.mxu0 0.0
    %876 = vmatpush1.msra.mxu0 0.0
    %877 = vmatprep.subr.mxu0 0.0
    %878 = vmatpush1.msra.mxu0 0.0
    %879 = vmatprep.subr.mxu0 0.0
    %880 = vmatpush1.msra.mxu0 0.0
    %881 = vmatprep.subr.mxu0 0.0
    %882 = vmatpush1.msra.mxu0 0.0
    %883 = vmatprep.subr.mxu0 0.0
    %884 = vmatpush1.msra.mxu0 0.0
    %885 = vmatprep.subr.mxu0 0.0
    %886 = vmatpush1.msra.mxu0 0.0
    %887 = vmatprep.subr.mxu0 0.0
    %888 = vmatpush1.msra.mxu0 0.0
    %889 = vmatprep.subr.mxu0 0.0
    %890 = vmatpush1.msra.mxu0 0.0
    %891 = vmatprep.subr.mxu0 0.0
    %892 = vmatpush1.msra.mxu0 0.0
    %893 = vmatprep.subr.mxu0 0.0
    %894 = vmatpush1.msra.mxu0 0.0
    %895 = vmatprep.subr.mxu0 0.0
    %896 = vmatpush1.msra.mxu0 0.0
    %897 = vmatprep.subr.mxu0 0.0
    %898 = vmatpush1.msra.mxu0 0.0
    %899 = vmatprep.subr.mxu0 0.0
    %900 = vmatpush1.msra.mxu0 0.0
    %901 = vmatprep.subr.mxu0 0.0
    %902 = vmatpush1.msra.mxu0 0.0
    %903 = vmatprep.subr.mxu0 0.0
    %904 = vmatpush1.msra.mxu0 0.0
    %905 = vmatprep.subr.mxu0 0.0
    %906 = vmatpush1.msra.mxu0 0.0
    %907 = vmatprep.subr.mxu0 0.0
    %908 = vmatpush1.msra.mxu0 0.0
    %909 = vmatprep.subr.mxu0 0.0
    %910 = vmatpush1.msra.mxu0 0.0
    %911 = vmatprep.subr.mxu0 0.0
    %912 = vmatpush1.msra.mxu0 0.0
    %913 = vmatprep.subr.mxu0 0.0
    %914 = vmatpush1.msra.mxu0 0.0
    %915 = vmatprep.subr.mxu0 0.0
    %916 = vmatpush1.msra.mxu0 0.0
    %917 = vmatprep.subr.mxu0 0.0
    %918 = vmatpush1.msra.mxu0 0.0
    %919 = vmatprep.subr.mxu0 0.0
    %920 = vmatpush1.msra.mxu0 0.0
    %921 = vmatprep.mubr.f32.mxu0 0.0
    %922 = vmatmul.mubr.f32.gmra.mrb[0].mxu0 %v853
    %v923 = vpop.f32.mrb[0].mxu0
    %v924 = vadd.f32 %v847, %v923
    %v925 = vpop.f32.mrb[0].mxu0
    %926 = vmatprep.mubr.f32.mxu0 0.0
    %927 = vmatmul.mubr.f32.gmra.mrb[0].mxu0 %v855
    %v928 = vpop.f32.mrb[0].mxu0
    %v929 = vadd.f32 %v847, %v928
    %v930 = vpop.f32.mrb[0].mxu0
    %931 = vdwg.mxu0
    %v932 = vmax.f32 %v924, 0.0
    %v933 = vmax.f32 %v929, 0.0
    %v934 = vld [vmem:[%s5] sm:$0xff]
    %v935 = vld [vmem:[%s5 + $0x8] sm:$0xff]
    %v936 = vld [vmem:[%s5 + $0x10] sm:$0xff]
    %v937 = vld [vmem:[%s5 + $0x18] sm:$0xff]
    %v938 = vld [vmem:[%s6] sm:$0x1]
    %v940 = vlaneseq
    %v941 = vshrl.u32 %v940, 7
    %v942 = vsub.s32 0, %v941
    %v943 = vrot.slane %v938, %v942
    %945 = vmatprep.subr.mxu0 0.0
    %946 = vmatpush1.msra.mxu0 %v934
    %947 = vmatprep.subr.mxu0 0.0
    %948 = vmatpush1.msra.mxu0 %v935
    %949 = vmatprep.subr.mxu0 0.0
    %950 = vmatpush1.msra.mxu0 %v936
    %951 = vmatprep.subr.mxu0 0.0
    %952 = vmatpush1.msra.mxu0 %v937
    %953 = vmatprep.subr.mxu0 0.0
    %954 = vmatpush1.msra.mxu0 0.0
    %955 = vmatprep.subr.mxu0 0.0
    %956 = vmatpush1.msra.mxu0 0.0
    %957 = vmatprep.subr.mxu0 0.0
    %958 = vmatpush1.msra.mxu0 0.0
    %959 = vmatprep.subr.mxu0 0.0
    %960 = vmatpush1.msra.mxu0 0.0
    %961 = vmatprep.subr.mxu0 0.0
    %962 = vmatpush1.msra.mxu0 0.0
    %963 = vmatprep.subr.mxu0 0.0
    %964 = vmatpush1.msra.mxu0 0.0
    %965 = vmatprep.subr.mxu0 0.0
    %966 = vmatpush1.msra.mxu0 0.0
    %967 = vmatprep.subr.mxu0 0.0
    %968 = vmatpush1.msra.mxu0 0.0
    %969 = vmatprep.subr.mxu0 0.0
    %970 = vmatpush1.msra.mxu0 0.0
    %971 = vmatprep.subr.mxu0 0.0
    %972 = vmatpush1.msra.mxu0 0.0
    %973 = vmatprep.subr.mxu0 0.0
    %974 = vmatpush1.msra.mxu0 0.0
    %975 = vmatprep.subr.mxu0 0.0
    %976 = vmatpush1.msra.mxu0 0.0
    %977 = vmatprep.subr.mxu0 0.0
    %978 = vmatpush1.msra.mxu0 0.0
    %979 = vmatprep.subr.mxu0 0.0
    %980 = vmatpush1.msra.mxu0 0.0
    %981 = vmatprep.subr.mxu0 0.0
    %982 = vmatpush1.msra.mxu0 0.0
    %983 = vmatprep.subr.mxu0 0.0
    %984 = vmatpush1.msra.mxu0 0.0
    %985 = vmatprep.subr.mxu0 0.0
    %986 = vmatpush1.msra.mxu0 0.0
    %987 = vmatprep.subr.mxu0 0.0
    %988 = vmatpush1.msra.mxu0 0.0
    %989 = vmatprep.subr.mxu0 0.0
    %990 = vmatpush1.msra.mxu0 0.0
    %991 = vmatprep.subr.mxu0 0.0
    %992 = vmatpush1.msra.mxu0 0.0
    %993 = vmatprep.subr.mxu0 0.0
    %994 = vmatpush1.msra.mxu0 0.0
    %995 = vmatprep.subr.mxu0 0.0
    %996 = vmatpush1.msra.mxu0 0.0
    %997 = vmatprep.subr.mxu0 0.0
    %998 = vmatpush1.msra.mxu0 0.0
    %999 = vmatprep.subr.mxu0 0.0
    %1000 = vmatpush1.msra.mxu0 0.0
    %1001 = vmatprep.subr.mxu0 0.0
    %1002 = vmatpush1.msra.mxu0 0.0
    %1003 = vmatprep.subr.mxu0 0.0
    %1004 = vmatpush1.msra.mxu0 0.0
    %1005 = vmatprep.subr.mxu0 0.0
    %1006 = vmatpush1.msra.mxu0 0.0
    %1007 = vmatprep.subr.mxu0 0.0
    %1008 = vmatpush1.msra.mxu0 0.0
    %1009 = vmatprep.mubr.f32.mxu0 0.0
    %1010 = vmatmul.mubr.f32.gmra.mrb[0].mxu0 %v80
    %v1011 = vpop.f32.mrb[0].mxu0
    %v1012 = vadd.f32 %v943, %v1011
    %v1013 = vpop.f32.mrb[0].mxu0
    %1014 = vmatprep.mubr.f32.mxu0 0.0
    %1015 = vmatmul.mubr.f32.gmra.mrb[0].mxu0 %v83
    %v1016 = vpop.f32.mrb[0].mxu0
    %v1017 = vadd.f32 %v943, %v1016
    %v1018 = vpop.f32.mrb[0].mxu0
    %1019 = vdwg.mxu0
    %vm1020 = vcmask 31744
    %v1021 = vsel %vm1020, %v1012, -inf
    %1022 = vmax.xlane.f32.xlu0 %v1021
    %v1023 = vpop.xlane.xlu0 %1022
    %v1024 = vsel %vm1020, %v1017, -inf
    %1025 = vmax.xlane.f32.xlu0 %v1024
    %v1026 = vpop.xlane.xlu0 %1025
    %v1027 = vsub.f32 %v1012, %v1023
    %v1028 = vsub.f32 %v1017, %v1026
    %v1029 = vmul.f32 %v1027, 1.442695
    %v1030 = vpow.pop %v1029
    %v1031 = vmul.f32 %v1028, 1.442695
    %v1032 = vpow.pop %v1031
    %v1033 = vsel %vm1020, %v1030, 0.0
    %1034 = vadd.xlane.f32.xlu0 %v1033
    %v1035 = vpop.xlane.xlu0 %1034
    %v1036 = vsel %vm1020, %v1032, 0.0
    %1037 = vadd.xlane.f32.xlu0 %v1036
    %v1038 = vpop.xlane.xlu0 %1037
    %v1039 = vrcp.pop %v1035
    %v1040 = vmul.f32 %v1030, %v1039
    %v1041 = vrcp.pop %v1038
    %v1042 = vmul.f32 %v1032, %v1041
    %1044 = vset.pattern.permute.xlu0 0
    %1045 = vperm.xlu0 %1044, %v1040
    %v1046 = vpop.permute.xlu0 %1045
    %1049 = vset.pattern.permute.xlu0 0
    %1050 = vperm.xlu0 %1049, %v1042
    %v1051 = vpop.permute.xlu0 %1050
    %v1053 = vmul.f32 %v1046, %v446
    %v1054 = vmul.f32 %v1051, %v447
    %1055 = vset.pattern.permute.xlu0 1
    %1056 = vperm.xlu0 %1055, %v1040
    %v1057 = vpop.permute.xlu0 %1056
    %1059 = vset.pattern.permute.xlu0 1
    %1060 = vperm.xlu0 %1059, %v1042
    %v1061 = vpop.permute.xlu0 %1060
    %v1063 = vmul.f32 %v1057, %v544
    %v1064 = vmul.f32 %v1061, %v545
    %v1065 = vadd.f32 %v1053, %v1063
    %v1066 = vadd.f32 %v1054, %v1064
    %1067 = vset.pattern.permute.xlu0 2
    %1068 = vperm.xlu0 %1067, %v1040
    %v1069 = vpop.permute.xlu0 %1068
    %1071 = vset.pattern.permute.xlu0 2
    %1072 = vperm.xlu0 %1071, %v1042
    %v1073 = vpop.permute.xlu0 %1072
    %v1075 = vmul.f32 %v1069, %v834
    %v1076 = vmul.f32 %v1073, %v835
    %v1077 = vadd.f32 %v1065, %v1075
    %v1078 = vadd.f32 %v1066, %v1076
    %1079 = vset.pattern.permute.xlu0 3
    %1080 = vperm.xlu0 %1079, %v1040
    %v1081 = vpop.permute.xlu0 %1080
    %1083 = vset.pattern.permute.xlu0 3
    %1084 = vperm.xlu0 %1083, %v1042
    %v1085 = vpop.permute.xlu0 %1084
    %v1087 = vmul.f32 %v1081, %v932
    %v1088 = vmul.f32 %v1085, %v933
    %v1089 = vadd.f32 %v1077, %v1087
    %v1090 = vadd.f32 %v1078, %v1088
    %1091 = vst [vmem:[#allocation7] sm:$0xff] %v1089
    %1092 = vst [vmem:[#allocation7 + $0x8] sm:$0xff] %v1090
    %s1093 = scalar_lea.vmem %s5, 32
    %v1094 = vld [vmem:[%s1093] sm:$0xff]
    %v1095 = vld [vmem:[%s1093 + $0x8] sm:$0xff]
    %v1096 = vld [vmem:[%s1093 + $0x10] sm:$0xff]
    %v1097 = vld [vmem:[%s1093 + $0x18] sm:$0xff]
    %s1098 = scalar_lea.vmem %s6, 1
    %v1099 = vld [vmem:[%s1098] sm:$0x1]
    %v1101 = vlaneseq
    %v1102 = vshrl.u32 %v1101, 7
    %v1103 = vsub.s32 0, %v1102
    %v1104 = vrot.slane %v1099, %v1103
    %1106 = vmatprep.subr.mxu0 0.0
    %1107 = vmatpush1.msra.mxu0 %v1094
    %1108 = vmatprep.subr.mxu0 0.0
    %1109 = vmatpush1.msra.mxu0 %v1095
    %1110 = vmatprep.subr.mxu0 0.0
    %1111 = vmatpush1.msra.mxu0 %v1096
    %1112 = vmatprep.subr.mxu0 0.0
    %1113 = vmatpush1.msra.mxu0 %v1097
    %1114 = vmatprep.subr.mxu0 0.0
    %1115 = vmatpush1.msra.mxu0 0.0
    %1116 = vmatprep.subr.mxu0 0.0
    %1117 = vmatpush1.msra.mxu0 0.0
    %1118 = vmatprep.subr.mxu0 0.0
    %1119 = vmatpush1.msra.mxu0 0.0
    %1120 = vmatprep.subr.mxu0 0.0
    %1121 = vmatpush1.msra.mxu0 0.0
    %1122 = vmatprep.subr.mxu0 0.0
    %1123 = vmatpush1.msra.mxu0 0.0
    %1124 = vmatprep.subr.mxu0 0.0
    %1125 = vmatpush1.msra.mxu0 0.0
    %1126 = vmatprep.subr.mxu0 0.0
    %1127 = vmatpush1.msra.mxu0 0.0
    %1128 = vmatprep.subr.mxu0 0.0
    %1129 = vmatpush1.msra.mxu0 0.0
    %1130 = vmatprep.subr.mxu0 0.0
    %1131 = vmatpush1.msra.mxu0 0.0
    %1132 = vmatprep.subr.mxu0 0.0
    %1133 = vmatpush1.msra.mxu0 0.0
    %1134 = vmatprep.subr.mxu0 0.0
    %1135 = vmatpush1.msra.mxu0 0.0
    %1136 = vmatprep.subr.mxu0 0.0
    %1137 = vmatpush1.msra.mxu0 0.0
    %1138 = vmatprep.subr.mxu0 0.0
    %1139 = vmatpush1.msra.mxu0 0.0
    %1140 = vmatprep.subr.mxu0 0.0
    %1141 = vmatpush1.msra.mxu0 0.0
    %1142 = vmatprep.subr.mxu0 0.0
    %1143 = vmatpush1.msra.mxu0 0.0
    %1144 = vmatprep.subr.mxu0 0.0
    %1145 = vmatpush1.msra.mxu0 0.0
    %1146 = vmatprep.subr.mxu0 0.0
    %1147 = vmatpush1.msra.mxu0 0.0
    %1148 = vmatprep.subr.mxu0 0.0
    %1149 = vmatpush1.msra.mxu0 0.0
    %1150 = vmatprep.subr.mxu0 0.0
    %1151 = vmatpush1.msra.mxu0 0.0
    %1152 = vmatprep.subr.mxu0 0.0
    %1153 = vmatpush1.msra.mxu0 0.0
    %1154 = vmatprep.subr.mxu0 0.0
    %1155 = vmatpush1.msra.mxu0 0.0
    %1156 = vmatprep.subr.mxu0 0.0
    %1157 = vmatpush1.msra.mxu0 0.0
    %1158 = vmatprep.subr.mxu0 0.0
    %1159 = vmatpush1.msra.mxu0 0.0
    %1160 = vmatprep.subr.mxu0 0.0
    %1161 = vmatpush1.msra.mxu0 0.0
    %1162 = vmatprep.subr.mxu0 0.0
    %1163 = vmatpush1.msra.mxu0 0.0
    %1164 = vmatprep.subr.mxu0 0.0
    %1165 = vmatpush1.msra.mxu0 0.0
    %1166 = vmatprep.subr.mxu0 0.0
    %1167 = vmatpush1.msra.mxu0 0.0
    %1168 = vmatprep.subr.mxu0 0.0
    %1169 = vmatpush1.msra.mxu0 0.0
    %1170 = vmatprep.mubr.f32.mxu0 0.0
    %1171 = vmatmul.mubr.f32.gmra.mrb[0].mxu0 %v176
    %v1172 = vpop.f32.mrb[0].mxu0
    %v1173 = vadd.f32 %v1104, %v1172
    %v1174 = vpop.f32.mrb[0].mxu0
    %1175 = vmatprep.mubr.f32.mxu0 0.0
    %1176 = vmatmul.mubr.f32.gmra.mrb[0].mxu0 %v179
    %v1177 = vpop.f32.mrb[0].mxu0
    %v1178 = vadd.f32 %v1104, %v1177
    %v1179 = vpop.f32.mrb[0].mxu0
    %1180 = vdwg.mxu0
    %v1181 = vsel %vm1020, %v1173, -inf
    %1182 = vmax.xlane.f32.xlu0 %v1181
    %v1183 = vpop.xlane.xlu0 %1182
    %v1184 = vsel %vm1020, %v1178, -inf
    %1185 = vmax.xlane.f32.xlu0 %v1184
    %v1186 = vpop.xlane.xlu0 %1185
    %v1187 = vsub.f32 %v1173, %v1183
    %v1188 = vsub.f32 %v1178, %v1186
    %v1189 = vmul.f32 %v1187, 1.442695
    %v1190 = vpow.pop %v1189
    %v1191 = vmul.f32 %v1188, 1.442695
    %v1192 = vpow.pop %v1191
    %v1193 = vsel %vm1020, %v1190, 0.0
    %1194 = vadd.xlane.f32.xlu0 %v1193
    %v1195 = vpop.xlane.xlu0 %1194
    %v1196 = vsel %vm1020, %v1192, 0.0
    %1197 = vadd.xlane.f32.xlu0 %v1196
    %v1198 = vpop.xlane.xlu0 %1197
    %v1199 = vrcp.pop %v1195
    %v1200 = vmul.f32 %v1190, %v1199
    %v1201 = vrcp.pop %v1198
    %v1202 = vmul.f32 %v1192, %v1201
    %1204 = vset.pattern.permute.xlu0 0
    %1205 = vperm.xlu0 %1204, %v1200
    %v1206 = vpop.permute.xlu0 %1205
    %1209 = vset.pattern.permute.xlu0 0
    %1210 = vperm.xlu0 %1209, %v1202
    %v1211 = vpop.permute.xlu0 %1210
    %v1213 = vmul.f32 %v1206, %v640
    %v1214 = vmul.f32 %v1211, %v641
    %1215 = vset.pattern.permute.xlu0 1
    %1216 = vperm.xlu0 %1215, %v1200
    %v1217 = vpop.permute.xlu0 %1216
    %1219 = vset.pattern.permute.xlu0 1
    %1220 = vperm.xlu0 %1219, %v1202
    %v1221 = vpop.permute.xlu0 %1220
    %v1223 = vmul.f32 %v1217, %v738
    %v1224 = vmul.f32 %v1221, %v739
    %v1225 = vadd.f32 %v1213, %v1223
    %v1226 = vadd.f32 %v1214, %v1224
    %1227 = vset.pattern.permute.xlu0 2
    %1228 = vperm.xlu0 %1227, %v1200
    %v1229 = vpop.permute.xlu0 %1228
    %1231 = vset.pattern.permute.xlu0 2
    %1232 = vperm.xlu0 %1231, %v1202
    %v1233 = vpop.permute.xlu0 %1232
    %v1235 = vmul.f32 %v1229, %v834
    %v1236 = vmul.f32 %v1233, %v835
    %v1237 = vadd.f32 %v1225, %v1235
    %v1238 = vadd.f32 %v1226, %v1236
    %1239 = vset.pattern.permute.xlu0 3
    %1240 = vperm.xlu0 %1239, %v1200
    %v1241 = vpop.permute.xlu0 %1240
    %1243 = vset.pattern.permute.xlu0 3
    %1244 = vperm.xlu0 %1243, %v1202
    %v1245 = vpop.permute.xlu0 %1244
    %v1247 = vmul.f32 %v1241, %v932
    %v1248 = vmul.f32 %v1245, %v933
    %v1249 = vadd.f32 %v1237, %v1247
    %v1250 = vadd.f32 %v1238, %v1248
    %s1251 = scalar_lea.vmem [#allocation7], 16
    %1252 = vst [vmem:[%s1251] sm:$0xff] %v1249
    %1253 = vst [vmem:[%s1251 + $0x8] sm:$0xff] %v1250
    %v1254 = vld [vmem:[%s7] sm:$0xff]
    %v1255 = vld [vmem:[%s7 + $0x8] sm:$0xff]
    %v1256 = vld [vmem:[%s7 + $0x10] sm:$0xff]
    %v1257 = vld [vmem:[%s7 + $0x18] sm:$0xff]
    %v1258 = vld [vmem:[%s8] sm:$0x1]
    %v1260 = vlaneseq
    %v1261 = vshrl.u32 %v1260, 7
    %v1262 = vsub.s32 0, %v1261
    %v1263 = vrot.slane %v1258, %v1262
    %1265 = vmatprep.subr.mxu0 0.0
    %1266 = vmatpush1.msra.mxu0 %v1254
    %1267 = vmatprep.subr.mxu0 0.0
    %1268 = vmatpush1.msra.mxu0 %v1255
    %1269 = vmatprep.subr.mxu0 0.0
    %1270 = vmatpush1.msra.mxu0 %v1256
    %1271 = vmatprep.subr.mxu0 0.0
    %1272 = vmatpush1.msra.mxu0 %v1257
    %1273 = vmatprep.subr.mxu0 0.0
    %1274 = vmatpush1.msra.mxu0 0.0
    %1275 = vmatprep.subr.mxu0 0.0
    %1276 = vmatpush1.msra.mxu0 0.0
    %1277 = vmatprep.subr.mxu0 0.0
    %1278 = vmatpush1.msra.mxu0 0.0
    %1279 = vmatprep.subr.mxu0 0.0
    %1280 = vmatpush1.msra.mxu0 0.0
    %1281 = vmatprep.subr.mxu0 0.0
    %1282 = vmatpush1.msra.mxu0 0.0
    %1283 = vmatprep.subr.mxu0 0.0
    %1284 = vmatpush1.msra.mxu0 0.0
    %1285 = vmatprep.subr.mxu0 0.0
    %1286 = vmatpush1.msra.mxu0 0.0
    %1287 = vmatprep.subr.mxu0 0.0
    %1288 = vmatpush1.msra.mxu0 0.0
    %1289 = vmatprep.subr.mxu0 0.0
    %1290 = vmatpush1.msra.mxu0 0.0
    %1291 = vmatprep.subr.mxu0 0.0
    %1292 = vmatpush1.msra.mxu0 0.0
    %1293 = vmatprep.subr.mxu0 0.0
    %1294 = vmatpush1.msra.mxu0 0.0
    %1295 = vmatprep.subr.mxu0 0.0
    %1296 = vmatpush1.msra.mxu0 0.0
    %1297 = vmatprep.subr.mxu0 0.0
    %1298 = vmatpush1.msra.mxu0 0.0
    %1299 = vmatprep.subr.mxu0 0.0
    %1300 = vmatpush1.msra.mxu0 0.0
    %1301 = vmatprep.subr.mxu0 0.0
    %1302 = vmatpush1.msra.mxu0 0.0
    %1303 = vmatprep.subr.mxu0 0.0
    %1304 = vmatpush1.msra.mxu0 0.0
    %1305 = vmatprep.subr.mxu0 0.0
    %1306 = vmatpush1.msra.mxu0 0.0
    %1307 = vmatprep.subr.mxu0 0.0
    %1308 = vmatpush1.msra.mxu0 0.0
    %1309 = vmatprep.subr.mxu0 0.0
    %1310 = vmatpush1.msra.mxu0 0.0
    %1311 = vmatprep.subr.mxu0 0.0
    %1312 = vmatpush1.msra.mxu0 0.0
    %1313 = vmatprep.subr.mxu0 0.0
    %1314 = vmatpush1.msra.mxu0 0.0
    %1315 = vmatprep.subr.mxu0 0.0
    %1316 = vmatpush1.msra.mxu0 0.0
    %1317 = vmatprep.subr.mxu0 0.0
    %1318 = vmatpush1.msra.mxu0 0.0
    %1319 = vmatprep.subr.mxu0 0.0
    %1320 = vmatpush1.msra.mxu0 0.0
    %1321 = vmatprep.subr.mxu0 0.0
    %1322 = vmatpush1.msra.mxu0 0.0
    %1323 = vmatprep.subr.mxu0 0.0
    %1324 = vmatpush1.msra.mxu0 0.0
    %1325 = vmatprep.subr.mxu0 0.0
    %1326 = vmatpush1.msra.mxu0 0.0
    %1327 = vmatprep.subr.mxu0 0.0
    %1328 = vmatpush1.msra.mxu0 0.0
    %1329 = vmatprep.mubr.f32.mxu0 0.0
    %1330 = vmatmul.mubr.f32.gmra.mrb[0].mxu0 %v272
    %v1331 = vpop.f32.mrb[0].mxu0
    %v1332 = vadd.f32 %v1263, %v1331
    %v1333 = vpop.f32.mrb[0].mxu0
    %1334 = vmatprep.mubr.f32.mxu0 0.0
    %1335 = vmatmul.mubr.f32.gmra.mrb[0].mxu0 %v275
    %v1336 = vpop.f32.mrb[0].mxu0
    %v1337 = vadd.f32 %v1263, %v1336
    %v1338 = vpop.f32.mrb[0].mxu0
    %1339 = vdwg.mxu0
    %vm1340 = vcmask 48128
    %v1341 = vsel %vm1340, %v1332, -inf
    %1342 = vmax.xlane.f32.xlu0 %v1341
    %v1343 = vpop.xlane.xlu0 %1342
    %v1344 = vsel %vm1340, %v1337, -inf
    %1345 = vmax.xlane.f32.xlu0 %v1344
    %v1346 = vpop.xlane.xlu0 %1345
    %v1347 = vsub.f32 %v1332, %v1343
    %v1348 = vsub.f32 %v1337, %v1346
    %v1349 = vmul.f32 %v1347, 1.442695
    %v1350 = vpow.pop %v1349
    %v1351 = vmul.f32 %v1348, 1.442695
    %v1352 = vpow.pop %v1351
    %v1353 = vsel %vm1340, %v1350, 0.0
    %1354 = vadd.xlane.f32.xlu0 %v1353
    %v1355 = vpop.xlane.xlu0 %1354
    %v1356 = vsel %vm1340, %v1352, 0.0
    %1357 = vadd.xlane.f32.xlu0 %v1356
    %v1358 = vpop.xlane.xlu0 %1357
    %v1359 = vrcp.pop %v1355
    %v1360 = vmul.f32 %v1350, %v1359
    %v1361 = vrcp.pop %v1358
    %v1362 = vmul.f32 %v1352, %v1361
    %1364 = vset.pattern.permute.xlu0 0
    %1365 = vperm.xlu0 %1364, %v1360
    %v1366 = vpop.permute.xlu0 %1365
    %1369 = vset.pattern.permute.xlu0 0
    %1370 = vperm.xlu0 %1369, %v1362
    %v1371 = vpop.permute.xlu0 %1370
    %v1373 = vmul.f32 %v1366, %v446
    %v1374 = vmul.f32 %v1371, %v447
    %1375 = vset.pattern.permute.xlu0 1
    %1376 = vperm.xlu0 %1375, %v1360
    %v1377 = vpop.permute.xlu0 %1376
    %1379 = vset.pattern.permute.xlu0 1
    %1380 = vperm.xlu0 %1379, %v1362
    %v1381 = vpop.permute.xlu0 %1380
    %v1383 = vmul.f32 %v1377, %v544
    %v1384 = vmul.f32 %v1381, %v545
    %v1385 = vadd.f32 %v1373, %v1383
    %v1386 = vadd.f32 %v1374, %v1384
    %1387 = vset.pattern.permute.xlu0 2
    %1388 = vperm.xlu0 %1387, %v1360
    %v1389 = vpop.permute.xlu0 %1388
    %1391 = vset.pattern.permute.xlu0 2
    %1392 = vperm.xlu0 %1391, %v1362
    %v1393 = vpop.permute.xlu0 %1392
    %v1395 = vmul.f32 %v1389, %v640
    %v1396 = vmul.f32 %v1393, %v641
    %v1397 = vadd.f32 %v1385, %v1395
    %v1398 = vadd.f32 %v1386, %v1396
    %1399 = vset.pattern.permute.xlu0 3
    %1400 = vperm.xlu0 %1399, %v1360
    %v1401 = vpop.permute.xlu0 %1400
    %1403 = vset.pattern.permute.xlu0 3
    %1404 = vperm.xlu0 %1403, %v1362
    %v1405 = vpop.permute.xlu0 %1404
    %v1407 = vmul.f32 %v1401, %v738
    %v1408 = vmul.f32 %v1405, %v739
    %v1409 = vadd.f32 %v1397, %v1407
    %v1410 = vadd.f32 %v1398, %v1408
    %1411 = vset.pattern.permute.xlu0 4
    %1412 = vperm.xlu0 %1411, %v1360
    %v1413 = vpop.permute.xlu0 %1412
    %1415 = vset.pattern.permute.xlu0 4
    %1416 = vperm.xlu0 %1415, %v1362
    %v1417 = vpop.permute.xlu0 %1416
    %v1419 = vmul.f32 %v1413, %v834
    %v1420 = vmul.f32 %v1417, %v835
    %v1421 = vadd.f32 %v1409, %v1419
    %v1422 = vadd.f32 %v1410, %v1420
    %1423 = vset.pattern.permute.xlu0 5
    %1424 = vperm.xlu0 %1423, %v1360
    %v1425 = vpop.permute.xlu0 %1424
    %1427 = vset.pattern.permute.xlu0 5
    %1428 = vperm.xlu0 %1427, %v1362
    %v1429 = vpop.permute.xlu0 %1428
    %v1431 = vmul.f32 %v1425, %v932
    %v1432 = vmul.f32 %v1429, %v933
    %v1433 = vadd.f32 %v1421, %v1431
    %v1434 = vadd.f32 %v1422, %v1432
    %s1435 = scalar_lea.vmem [#allocation7], 32
    %1436 = vst [vmem:[%s1435] sm:$0xff] %v1433
    %1437 = vst [vmem:[%s1435 + $0x8] sm:$0xff] %v1434
    // Predicated region
    $region46: #{tpu_custom_call.1} parent=1 // pred_check
      _
    $region47: #{tpu_custom_call.1} parent=1 // pred_check_branch
      %1439 = sbr.rel (0) target = $region49
    $region48: #{tpu_custom_call.1} parent=1 // pred_region
      %s1441 = ssub.s32 768, 768
      %1442 = vsyncadd [#allocation4], %s1441
      %s1443 = sshll.u32 [#allocation7], 4
      %s1444 = int_to_ptr.vmem [resolvable:$true] %s1443
      %1449 = dma.vmem_to_hbm [thread:$0]  %s1444, 768, %s9, [#allocation4], 128, 128, 8
    $region49: #{tpu_custom_call.1} parent=1 // pred_fallthru
      _
    // Predicated region
    $region50: #{tpu_custom_call.1} parent=1 // pred_check
      _
    $region51: #{tpu_custom_call.1} parent=1 // pred_check_branch
      %1451 = sbr.rel (0) target = $region53
    $region52: #{tpu_custom_call.1} parent=1 // pred_region
      %1452 = dma.done [#allocation4], 768
    $region53: #{tpu_custom_call.1} parent=1 // pred_fallthru
      _
    %1453 = vsyncpa [#allocation3], 1
    %1454 = vsyncpa [#allocation6], 1
    %1455 = vsyncpa [#allocation4], 1

</llo_original>
